<compile_context>
chip_gen: v7x
topology: tpu7x:2x2x1
jax: 0.10.0
libtpu: 0.0.40
codegen_flags: <defaults>
</compile_context>

<pallas_src>
import functools

import jax
import jax.numpy as jnp
from jax import lax
from jax.experimental import pallas as pl
from jax.experimental.pallas import tpu as pltpu

_BF16_SUBLANE = 16  # bf16 sublane-packing tile -> layout-trivial reshapes


def _round_up(x, m):
    return ((x + m - 1) // m) * m


# ----------------------------------------------------------------------------
# In-kernel helpers
# ----------------------------------------------------------------------------
def _conv_rows(x_ref, w_ref, row_start, tr, wo, kh, kw, cout):
    """Conv of `tr` output rows: sum of kh*kw shifted (tr*wo, Cin) x (Cin, Cout)
    bf16 matmuls, accumulated in f32."""
    cin = x_ref.shape[-1]
    acc = jnp.zeros((tr * wo, cout), jnp.float32)
    for ky in range(kh):
        for kx in range(kw):
            xs = x_ref[0, pl.ds(row_start + ky, tr), pl.ds(kx, wo), :]  # (tr,wo,cin)
            xs = xs.reshape(tr * wo, cin)  # layout-trivial (wo % 16 == 0)
            acc = acc + jnp.dot(xs, w_ref[ky * kw + kx],
                                preferred_element_type=jnp.float32)
    return acc


def _conv_bias_act_kernel(x_ref, w_ref, b_ref, o_ref, *,
                          tr, wo, kh, kw, do_act, alpha=0.2):
    """conv + bias [+ LeakyReLU]; one TR-row block stored directly per step."""
    i = pl.program_id(1)
    cout = o_ref.shape[-1]
    rows = _conv_rows(x_ref, w_ref, i * tr, tr, wo, kh, kw, cout)
    rows = rows + b_ref[...]                                   # (1, cout) f32
    if do_act:
        rows = jnp.where(rows > 0, rows, alpha * rows)
    o_ref[0] = rows.reshape(tr, wo, cout).astype(o_ref.dtype)


def _conv_norm_act_kernel(x_ref, w_ref, o_ref, acc_ref, sum_ref, sq_ref, *,
                          tr, wo, kh, kw, ho_valid, wo_valid,
                          do_act, alpha=0.2, eps=1e-5):
    """Two-pass conv + InstanceNorm(affine=False) [+ LeakyReLU].
    pass 0: conv + single-pass stats into VMEM; pass 1: normalize + store."""
    p = pl.program_id(1)      # 0 = conv/stats, 1 = normalize/store
    i = pl.program_id(2)      # row-block index
    row_start = i * tr
    cout = o_ref.shape[-1]

    @pl.when(jnp.logical_and(p == 0, i == 0))
    def _init_stats():
        sum_ref[...] = jnp.zeros_like(sum_ref)
        sq_ref[...] = jnp.zeros_like(sq_ref)

    @pl.when(p == 0)
    def _conv_and_stats():
        rows = _conv_rows(x_ref, w_ref, row_start, tr, wo, kh, kw, cout)
        rows3 = rows.reshape(tr, wo, cout)
        acc_ref[pl.ds(row_start, tr)] = rows3
        if (ho_valid % tr != 0) or (wo_valid != wo):
            # Mask the zero-padded tail rows/cols out of the statistics.
            rid = lax.broadcasted_iota(jnp.int32, (tr, wo, 1), 0)
            cid = lax.broadcasted_iota(jnp.int32, (tr, wo, 1), 1)
            valid = jnp.logical_and(row_start + rid < ho_valid, cid < wo_valid)
            rows3 = jnp.where(valid, rows3, 0.0)
        sum_ref[...] += jnp.sum(rows3, axis=(0, 1), keepdims=True)
        sq_ref[...] += jnp.sum(rows3 * rows3, axis=(0, 1), keepdims=True)

    @pl.when(p == 1)
    def _normalize_and_store():
        blk = acc_ref[pl.ds(row_start, tr)]                    # (tr, wo, cout) f32
        inv_n = 1.0 / float(ho_valid * wo_valid)
        mean = sum_ref[...] * inv_n                             # (1, 1, cout)
        var = jnp.maximum(sq_ref[...] * inv_n - mean * mean, 0.0)
        y = (blk - mean) * lax.rsqrt(var + eps)
        if do_act:
            y = jnp.where(y > 0, y, alpha * y)
        o_ref[0] = y.astype(o_ref.dtype)


# ----------------------------------------------------------------------------
# Host-side glue: pad, space-to-depth, weight reorder, VMEM budget
# ----------------------------------------------------------------------------
def _space_to_depth2(x):
    """(N, H, W, C) -> (N, H//2, W//2, 4C): stride-2 4x4 conv -> stride-1 2x2."""
    N, H, W, C = x.shape
    assert H % 2 == 0 and W % 2 == 0, "stride-2 layer needs even padded size"
    x = x.reshape(N, H // 2, 2, W // 2, 2, C)
    x = x.transpose(0, 1, 3, 2, 4, 5)
    return x.reshape(N, H // 2, W // 2, 4 * C)


def _weights_for_layer(w_oihw, stride):
    """(C_out, C_in, 4, 4) -> (taps, C_in_eff, C_out) matching the kernel."""
    C_out, C_in, kh, kw = w_oihw.shape
    if stride == 2:
        wr = w_oihw.reshape(C_out, C_in, 2, 2, 2, 2)      # (Co,Ci,dy,py,dx,px)
        wr = wr.transpose(2, 4, 3, 5, 1, 0)               # (dy,dx,py,px,Ci,Co)
        return wr.reshape(4, 4 * C_in, C_out), 2, 2
    wr = w_oihw.transpose(2, 3, 1, 0)                     # (kh,kw,Ci,Co)
    return wr.reshape(kh * kw, C_in, C_out), kh, kw


def _vmem_limit(nbytes_est):
    try:
        cap = int(getattr(pltpu.get_tpu_info(), "vmem_capacity_bytes", 128 << 20))
    except Exception:
        cap = 128 << 20
    hi = int(0.75 * cap)                 # leave compiler-internal headroom (v7x-safe)
    return int(min(max(int(1.5 * nbytes_est) + (8 << 20), 32 << 20), hi))


def disc_conv_layer(x_nhwc, w_oihw, b, *, stride, do_norm, do_act,
                    out_dtype=jnp.bfloat16, pad=1):
    """conv(k=4, pad=1) [+ InstanceNorm2d(affine=False)] [+ LeakyReLU(0.2)]."""
    N = x_nhwc.shape[0]
    C_out = w_oihw.shape[0]

    xp = jnp.pad(x_nhwc.astype(jnp.bfloat16),
                 ((0, 0), (pad, pad), (pad, pad), (0, 0)))
    if stride == 2:
        xp = _space_to_depth2(xp)
    w_mat, kh, kw = _weights_for_layer(w_oihw, stride)

    # Lane-dense output for the final 1-channel conv: pad C_out to 128.
    C_out_p = C_out
    if C_out < 8:
        C_out_p = 128
        w_mat = jnp.pad(w_mat, ((0, 0), (0, 0), (0, C_out_p - C_out)))
        b = jnp.pad(b, ((0, C_out_p - C_out),))

    _, Hp, Wp, Cin_eff = xp.shape
    Ho = Hp - kh + 1
    Wo = Wp - kw + 1

    # Row blocking + padding so every slice is in-bounds and reshapes are trivial.
    Wo_pad = _round_up(Wo, _BF16_SUBLANE)
    TR = max(1, min(Ho, 32, max(8, 256 // Wo_pad)))
    nb = int(pl.cdiv(Ho, TR))
    Ho_pad = nb * TR
    Hp_need = Ho_pad + kh - 1
    Wp_need = Wo_pad + kw - 1
    xp = jnp.pad(xp, ((0, 0), (0, Hp_need - Hp), (0, Wp_need - Wp), (0, 0)))

    w_mat = w_mat.astype(jnp.bfloat16)
    bpe_out = jnp.dtype(out_dtype).itemsize

    est = (2 * 2 * Hp_need * Wp_need * Cin_eff            # x (bf16, double-buffered)
           + 2 * 2 * kh * kw * Cin_eff * C_out_p          # weights (bf16, 2 bufs)
           + 2 * bpe_out * TR * Wo_pad * C_out_p          # output blocks
           + 2 * 4 * C_out_p)                             # bias

    if do_norm:
        kernel = functools.partial(
            _conv_norm_act_kernel, tr=TR, wo=Wo_pad, kh=kh, kw=kw,
            ho_valid=Ho, wo_valid=Wo, do_act=do_act)
        grid = (N, 2, nb)
        in_specs = [
            pl.BlockSpec((1, Hp_need, Wp_need, Cin_eff), lambda n, p, i: (n, 0, 0, 0)),
            pl.BlockSpec((kh * kw, Cin_eff, C_out_p), lambda n, p, i: (0, 0, 0)),
        ]
        operands = [xp, w_mat]
        # Out block stays parked at (n, 0) during the stats pass and advances
        # one row-block per step in the normalize pass -> pipelined writeback.
        out_specs = pl.BlockSpec((1, TR, Wo_pad, C_out_p),
                                 lambda n, p, i: (n, i * p, 0, 0))
        scratch = [pltpu.VMEM((Ho_pad, Wo_pad, C_out_p), jnp.float32),  # conv acc
                   pltpu.VMEM((1, 1, C_out_p), jnp.float32),            # sum
                   pltpu.VMEM((1, 1, C_out_p), jnp.float32)]            # sumsq
        dims = ("parallel", "arbitrary", "arbitrary")
        est += 4 * Ho_pad * Wo_pad * C_out_p + 8 * C_out_p
    else:
        kernel = functools.partial(
            _conv_bias_act_kernel, tr=TR, wo=Wo_pad, kh=kh, kw=kw, do_act=do_act)
        grid = (N, nb)
        in_specs = [
            pl.BlockSpec((1, Hp_need, Wp_need, Cin_eff), lambda n, i: (n, 0, 0, 0)),
            pl.BlockSpec((kh * kw, Cin_eff, C_out_p), lambda n, i: (0, 0, 0)),
            pl.BlockSpec((1, C_out_p), lambda n, i: (0, 0)),
        ]
        operands = [xp, w_mat, b.reshape(1, C_out_p).astype(jnp.float32)]
        out_specs = pl.BlockSpec((1, TR, Wo_pad, C_out_p), lambda n, i: (n, i, 0, 0))
        scratch = []
        dims = ("parallel", "parallel")

    out = pl.pallas_call(
        kernel,
        out_shape=jax.ShapeDtypeStruct((N, Ho_pad, Wo_pad, C_out_p), out_dtype),
        grid=grid,
        in_specs=in_specs,
        out_specs=out_specs,
        scratch_shapes=scratch,
        compiler_params=pltpu.CompilerParams(
            dimension_semantics=dims,
            vmem_limit_bytes=_vmem_limit(est)),
    )(*operands)

    return out[:, :Ho, :Wo, :C_out]


# ----------------------------------------------------------------------------
# NLayerDiscriminator: parameter construction + forward
# ----------------------------------------------------------------------------
def make_params(key, input_nc=3, ndf=64, n_layers=3):
    """Deterministic synthetic parameters; shapes follow the PyTorch __init__."""
    layers = []
    kw = 4

    def mk(key, c_out, c_in):
        kw_, kb_ = jax.random.split(key)
        w = jax.random.normal(kw_, (c_out, c_in, kw, kw), jnp.float32) * 0.05
        b = jax.random.normal(kb_, (c_out,), jnp.float32) * 0.05
        return w, b

    keys = jax.random.split(key, n_layers + 2)
    w, b = mk(keys[0], ndf, input_nc)
    layers.append(dict(w=w, b=b, stride=2, norm=False, act=True))
    nf_mult = 1
    for n in range(1, n_layers):
        nf_mult_prev, nf_mult = nf_mult, min(2 ** n, 8)
        w, b = mk(keys[n], ndf * nf_mult, ndf * nf_mult_prev)
        layers.append(dict(w=w, b=b, stride=2, norm=True, act=True))
    nf_mult_prev, nf_mult = nf_mult, min(2 ** n_layers, 8)
    w, b = mk(keys[n_layers], ndf * nf_mult, ndf * nf_mult_prev)
    layers.append(dict(w=w, b=b, stride=1, norm=True, act=True))
    w, b = mk(keys[n_layers + 1], 1, ndf * nf_mult)
    layers.append(dict(w=w, b=b, stride=1, norm=False, act=False))
    return layers


def nlayer_discriminator_forward(x_nchw, layers):
    """Forward pass. Input/output are NCHW like PyTorch."""
    y = jnp.transpose(x_nchw, (0, 2, 3, 1))                     # NCHW -> NHWC
    for li, lyr in enumerate(layers):
        last = li == len(layers) - 1
        y = disc_conv_layer(
            y, lyr["w"], lyr["b"], stride=lyr["stride"],
            do_norm=lyr["norm"], do_act=lyr["act"],
            out_dtype=jnp.float32 if last else jnp.bfloat16)
    return jnp.transpose(y, (0, 3, 1, 2)).astype(jnp.float32)   # NHWC -> NCHW


# ----------------------------------------------------------------------------
# Pure-JAX reference (same bf16-operand / f32-accumulate numerics)
# ----------------------------------------------------------------------------
def reference_forward(x_nchw, layers):
    y = x_nchw
    for lyr in layers:
        s = lyr["stride"]
        y = lax.conv_general_dilated(
            y.astype(jnp.bfloat16), lyr["w"].astype(jnp.bfloat16),
            (s, s), [(1, 1), (1, 1)],
            dimension_numbers=("NCHW", "OIHW", "NCHW"),
            preferred_element_type=jnp.float32)
        y = y + lyr["b"][None, :, None, None]
        if lyr["norm"]:
            mean = y.mean(axis=(2, 3), keepdims=True)
            var = ((y - mean) ** 2).mean(axis=(2, 3), keepdims=True)
            y = (y - mean) / jnp.sqrt(var + 1e-5)
        if lyr["act"]:
            y = jnp.where(y > 0, y, 0.2 * y)
    return y


if __name__ == "__main__":
    key = jax.random.PRNGKey(0)
    k_in, k_par = jax.random.split(key)

    # Small but shape-consistent config: input_nc=3, ndf=16, n_layers=3,
    # input 2 x 3 x 32 x 32  ->  output 2 x 1 x 2 x 2.
    input_nc, ndf, n_layers = 3, 16, 3
    x = jax.random.normal(k_in, (2, input_nc, 32, 32), jnp.float32)

    layers = make_params(k_par, input_nc=input_nc, ndf=ndf, n_layers=n_layers)

    out = jax.block_until_ready(nlayer_discriminator_forward(x, layers))
    ref = jax.block_until_ready(reference_forward(x, layers))

    assert out.shape == ref.shape, (out.shape, ref.shape)
    max_err = float(jnp.max(jnp.abs(out - ref)))
    assert jnp.allclose(out, ref, atol=3e-2, rtol=3e-2), max_err

    print("KERNEL_OK")
</pallas_src>

<mosaic_0001>
module attributes {stable_mosaic.version = 11 : i64} {
  func.func @_conv_bias_act_kernel(%arg0: i32, %arg1: i32, %arg2: memref<1x17x17x12xbf16, #tpu.memory_space<vmem>>, %arg3: memref<4x12x16xbf16, #tpu.memory_space<vmem>>, %arg4: memref<1x16xf32, #tpu.memory_space<vmem>>, %arg5: memref<1x16x16x16xbf16, #tpu.memory_space<vmem>>) attributes {dimension_semantics = [#tpu.dimension_semantics<parallel>, #tpu.dimension_semantics<parallel>], iteration_bounds = array<i64: 2, 1>, scalar_prefetch = 0 : i64, scratch_operands = 0 : i64, tpu.core_type = #tpu.core_type<tc>, window_params = [{transform_indices = @transform_0, window_bounds = array<i64: 1, 17, 17, 12>}, {pipeline_mode = #tpu.pipeline_mode<synchronous>, transform_indices = @transform_1, window_bounds = array<i64: 4, 12, 16>}, {pipeline_mode = #tpu.pipeline_mode<synchronous>, transform_indices = @transform_2, window_bounds = array<i64: 1, 16>}, {transform_indices = @transform_3, window_bounds = array<i64: 1, 16, 16, 16>}]} {
    %c16_i32 = arith.constant 16 : i32
    %0 = arith.muli %arg1, %c16_i32 : i32
    %cst = arith.constant 0.000000e+00 : f32
    %1 = vector.broadcast %cst : f32 to vector<256x16xf32>
    %c0_i32 = arith.constant 0 : i32
    %2 = arith.addi %0, %c0_i32 : i32
    %c0 = arith.constant 0 : index
    %3 = arith.index_cast %2 : i32 to index
    %c0_0 = arith.constant 0 : index
    %c0_1 = arith.constant 0 : index
    %4 = vector.load %arg2[%c0, %3, %c0_0, %c0_1] : memref<1x17x17x12xbf16, #tpu.memory_space<vmem>>, vector<1x16x16x12xbf16>
    %5 = vector.shape_cast %4 : vector<1x16x16x12xbf16> to vector<16x16x12xbf16>
    %6 = vector.shape_cast %5 : vector<16x16x12xbf16> to vector<256x12xbf16>
    %c0_2 = arith.constant 0 : index
    %c0_3 = arith.constant 0 : index
    %c0_4 = arith.constant 0 : index
    %7 = vector.load %arg3[%c0_2, %c0_3, %c0_4] : memref<4x12x16xbf16, #tpu.memory_space<vmem>>, vector<1x12x16xbf16>
    %8 = vector.shape_cast %7 : vector<1x12x16xbf16> to vector<12x16xbf16>
    %cst_5 = arith.constant dense<0.000000e+00> : vector<256x16xf32>
    %9 = tpu.matmul %6, %8, %cst_5 {dimension_numbers = #tpu.dot_dimension_numbers<[1], [0], [0], [1], [0, 0, 1, 1], [], []>} : vector<256x12xbf16>, vector<12x16xbf16>, vector<256x16xf32> -> vector<256x16xf32>
    %10 = arith.addf %1, %9 : vector<256x16xf32>
    %c0_i32_6 = arith.constant 0 : i32
    %11 = arith.addi %0, %c0_i32_6 : i32
    %c0_7 = arith.constant 0 : index
    %12 = arith.index_cast %11 : i32 to index
    %c1 = arith.constant 1 : index
    %c0_8 = arith.constant 0 : index
    %13 = vector.load %arg2[%c0_7, %12, %c1, %c0_8] : memref<1x17x17x12xbf16, #tpu.memory_space<vmem>>, vector<1x16x16x12xbf16>
    %14 = vector.shape_cast %13 : vector<1x16x16x12xbf16> to vector<16x16x12xbf16>
    %15 = vector.shape_cast %14 : vector<16x16x12xbf16> to vector<256x12xbf16>
    %c1_9 = arith.constant 1 : index
    %c0_10 = arith.constant 0 : index
    %c0_11 = arith.constant 0 : index
    %16 = vector.load %arg3[%c1_9, %c0_10, %c0_11] : memref<4x12x16xbf16, #tpu.memory_space<vmem>>, vector<1x12x16xbf16>
    %17 = vector.shape_cast %16 : vector<1x12x16xbf16> to vector<12x16xbf16>
    %cst_12 = arith.constant dense<0.000000e+00> : vector<256x16xf32>
    %18 = tpu.matmul %15, %17, %cst_12 {dimension_numbers = #tpu.dot_dimension_numbers<[1], [0], [0], [1], [0, 0, 1, 1], [], []>} : vector<256x12xbf16>, vector<12x16xbf16>, vector<256x16xf32> -> vector<256x16xf32>
    %19 = arith.addf %10, %18 : vector<256x16xf32>
    %c1_i32 = arith.constant 1 : i32
    %20 = arith.addi %0, %c1_i32 : i32
    %c0_13 = arith.constant 0 : index
    %21 = arith.index_cast %20 : i32 to index
    %c0_14 = arith.constant 0 : index
    %c0_15 = arith.constant 0 : index
    %22 = vector.load %arg2[%c0_13, %21, %c0_14, %c0_15] : memref<1x17x17x12xbf16, #tpu.memory_space<vmem>>, vector<1x16x16x12xbf16>
    %23 = vector.shape_cast %22 : vector<1x16x16x12xbf16> to vector<16x16x12xbf16>
    %24 = vector.shape_cast %23 : vector<16x16x12xbf16> to vector<256x12xbf16>
    %c2 = arith.constant 2 : index
    %c0_16 = arith.constant 0 : index
    %c0_17 = arith.constant 0 : index
    %25 = vector.load %arg3[%c2, %c0_16, %c0_17] : memref<4x12x16xbf16, #tpu.memory_space<vmem>>, vector<1x12x16xbf16>
    %26 = vector.shape_cast %25 : vector<1x12x16xbf16> to vector<12x16xbf16>
    %cst_18 = arith.constant dense<0.000000e+00> : vector<256x16xf32>
    %27 = tpu.matmul %24, %26, %cst_18 {dimension_numbers = #tpu.dot_dimension_numbers<[1], [0], [0], [1], [0, 0, 1, 1], [], []>} : vector<256x12xbf16>, vector<12x16xbf16>, vector<256x16xf32> -> vector<256x16xf32>
    %28 = arith.addf %19, %27 : vector<256x16xf32>
    %c1_i32_19 = arith.constant 1 : i32
    %29 = arith.addi %0, %c1_i32_19 : i32
    %c0_20 = arith.constant 0 : index
    %30 = arith.index_cast %29 : i32 to index
    %c1_21 = arith.constant 1 : index
    %c0_22 = arith.constant 0 : index
    %31 = vector.load %arg2[%c0_20, %30, %c1_21, %c0_22] : memref<1x17x17x12xbf16, #tpu.memory_space<vmem>>, vector<1x16x16x12xbf16>
    %32 = vector.shape_cast %31 : vector<1x16x16x12xbf16> to vector<16x16x12xbf16>
    %33 = vector.shape_cast %32 : vector<16x16x12xbf16> to vector<256x12xbf16>
    %c3 = arith.constant 3 : index
    %c0_23 = arith.constant 0 : index
    %c0_24 = arith.constant 0 : index
    %34 = vector.load %arg3[%c3, %c0_23, %c0_24] : memref<4x12x16xbf16, #tpu.memory_space<vmem>>, vector<1x12x16xbf16>
    %35 = vector.shape_cast %34 : vector<1x12x16xbf16> to vector<12x16xbf16>
    %cst_25 = arith.constant dense<0.000000e+00> : vector<256x16xf32>
    %36 = tpu.matmul %33, %35, %cst_25 {dimension_numbers = #tpu.dot_dimension_numbers<[1], [0], [0], [1], [0, 0, 1, 1], [], []>} : vector<256x12xbf16>, vector<12x16xbf16>, vector<256x16xf32> -> vector<256x16xf32>
    %37 = arith.addf %28, %36 : vector<256x16xf32>
    %c0_26 = arith.constant 0 : index
    %c0_27 = arith.constant 0 : index
    %38 = vector.load %arg4[%c0_26, %c0_27] : memref<1x16xf32, #tpu.memory_space<vmem>>, vector<1x16xf32>
    %39 = vector.broadcast %38 : vector<1x16xf32> to vector<256x16xf32>
    %40 = arith.addf %37, %39 : vector<256x16xf32>
    %cst_28 = arith.constant 0.000000e+00 : f32
    %41 = vector.broadcast %cst_28 : f32 to vector<256x16xf32>
    %42 = arith.cmpf ogt, %40, %41 : vector<256x16xf32>
    %cst_29 = arith.constant 2.000000e-01 : f32
    %43 = vector.broadcast %cst_29 : f32 to vector<256x16xf32>
    %44 = arith.mulf %43, %40 : vector<256x16xf32>
    %45 = arith.select %42, %40, %44 : vector<256x16xi1>, vector<256x16xf32>
    %46 = vector.shape_cast %45 : vector<256x16xf32> to vector<16x16x16xf32>
    %47 = arith.truncf %46 : vector<16x16x16xf32> to vector<16x16x16xbf16>
    %c0_30 = arith.constant 0 : index
    %c0_31 = arith.constant 0 : index
    %c0_32 = arith.constant 0 : index
    %c0_33 = arith.constant 0 : index
    %48 = vector.load %arg5[%c0_30, %c0_31, %c0_32, %c0_33] : memref<1x16x16x16xbf16, #tpu.memory_space<vmem>>, vector<1x16x16x16xbf16>
    %49 = vector.shape_cast %48 : vector<1x16x16x16xbf16> to vector<16x16x16xbf16>
    %50 = vector.shape_cast %47 : vector<16x16x16xbf16> to vector<1x16x16x16xbf16>
    tpu.vector_store %arg5[%c0_30, %c0_31, %c0_32, %c0_33], %50 {strides = array<i32>} : memref<1x16x16x16xbf16, #tpu.memory_space<vmem>>, vector<1x16x16x16xbf16>,
    return
  }
  func.func @transform_0(%arg0: i32, %arg1: i32) -> (i32, i32, i32, i32) {
    %c0_i32 = arith.constant 0 : i32
    %c0_i32_0 = arith.constant 0 : i32
    %c0_i32_1 = arith.constant 0 : i32
    %c0_i32_2 = arith.constant 0 : i32
    return %arg0, %c0_i32, %c0_i32_0, %c0_i32_1 : i32, i32, i32, i32
  }
  func.func @transform_1(%arg0: i32, %arg1: i32) -> (i32, i32, i32) {
    %c0_i32 = arith.constant 0 : i32
    %c0_i32_0 = arith.constant 0 : i32
    %c0_i32_1 = arith.constant 0 : i32
    %c0_i32_2 = arith.constant 0 : i32
    return %c0_i32, %c0_i32_0, %c0_i32_1 : i32, i32, i32
  }
  func.func @transform_2(%arg0: i32, %arg1: i32) -> (i32, i32) {
    %c0_i32 = arith.constant 0 : i32
    %c0_i32_0 = arith.constant 0 : i32
    %c0_i32_1 = arith.constant 0 : i32
    return %c0_i32, %c0_i32_0 : i32, i32
  }
  func.func @transform_3(%arg0: i32, %arg1: i32) -> (i32, i32, i32, i32) {
    %c0_i32 = arith.constant 0 : i32
    %c0_i32_0 = arith.constant 0 : i32
    %c0_i32_1 = arith.constant 0 : i32
    return %arg0, %arg1, %c0_i32, %c0_i32_0 : i32, i32, i32, i32
  }
}

</mosaic_0001>

<llo_original>
// kernel: tpu_custom_call.1
$region0: #{tpu_custom_call.1}
  #allocation0 [shape = 'u32[]', space=smem, size = 0x4, offset = 0x4, fixed_abs, tag = 'smem constant byte address 0x4 - core index']
  #allocation1 [shape = 'u32[144,128]{1,0:T(1,128)}', space=vmem, size = 0x12000, scoped, tag = 'internal scratch']
  %s0 = inlined_call_operand.vmem [shape: bf16[2,17,17,12], index: 0, kind: input, shape index: {}]
  %s1 = inlined_call_operand.vmem [shape: bf16[4,12,16], index: 1, kind: input, shape index: {}]
  %s2 = inlined_call_operand.vmem [shape: f32[1,16], index: 2, kind: input, shape index: {}]
  %s3 = inlined_call_operand.hbm [shape: bf16[2,16,16,16], index: 3, kind: output, shape index: {}]
  %s4 = sld [smem:[#allocation0]]
  $region45: #{tpu_custom_call.1} parent=0
    _
  %s6 = ssub.s32 1, %s4
  %s7 = scalar_select 0, %s6, %s4
  $region1: #{tpu_custom_call.1} parent=0
    #allocation2 [shape = 'u8[131072]{0}', space=vmem, size = 0x20000, scoped, tag = 'output window, operand 0']
    #allocation3 [shape = 's32[2]{0}', space=sflag, size = 0x8, scoped, tag = 'scoped memory for tpu_custom_call.1']
    %8 = vsyncpa [#allocation3], 0
    %s9 = scalar_lea.sflag [#allocation3], 1
    %10 = vsyncpa %s9, 0
    loop: start=0, step=1, limit=4
    $region2: #{tpu_custom_call.1} parent=1 // loop_pre_header
      _
    $region3: #{tpu_custom_call.1} parent=1 // loop_header
      %s12 = sphi 0, %s16
      %p13 = scmp.ge.s32.totalorder %s12, 4
      %s19 = sphi 0, %s31
      %s20 = sphi 0, %s27
      %s21 = sphi 0, %s19
      %s22 = sphi 0, %s20
      %s23 = sphi 0, %s21
      %s24 = sphi 0, %s22
      %s34 = sphi 0, %s36
      %s37 = sphi 0, %s34
      %s38 = sphi 0, %s37
      %s54 = sphi 0, %s38
      %s58 = sphi 0, %s58
      %s60 = sphi 0, %s58
      %s61 = sphi 0, %s60
      %s75 = sphi 0, %s61
      %s79 = sphi 0, %s79
      %s81 = sphi 0, %s79
      %s82 = sphi 0, %s81
      %s96 = sphi 0, %s82
      %s104 = sphi 0, %s106
      %s107 = sphi 0, %s104
      %s108 = sphi 0, %s107
      %s124 = sphi 0, %s108
    $region4: #{tpu_custom_call.1} parent=1 // loop_header_branch
      %15 = sbr.rel (%p13) target = $region8
    $region5: #{tpu_custom_call.1} parent=1 // loop_body
      %s17 = ssub.s32 %s12, 1
      %s18 = ssub.s32 %s12, 2
      %s25 = sadd.s32 1, %s20
      %p26 = scmp.ge.s32.totalorder %s25, 1
      %s27 = scalar_select %p26, 0, %s25
      %s28 = sadd.s32 1, %s19
      %s29 = scalar_select %p26, %s28, %s19
      %p30 = scmp.ge.s32.totalorder %s29, 2
      %s31 = scalar_select %p30, 0, %s29
      %s32 = ssub.s32 %s19, %s31
      %p33 = scmp.eq.s32.totalorder %s32, 0
      %s35 = sadd.s32 %s34, 1
      %s36 = scalar_select %p33, %s34, %s35
      %p39 = pneg %p33
      %p40 = scmp.eq.s32.totalorder %s12, 1
      %p41 = por %p39, %p40
      %p42 = scmp.ne.s32.totalorder %s34, %s37
      %p43 = scmp.eq.s32.totalorder %s12, 0
      %p44 = por %p42, %p43
      %p45 = scmp.ne.s32.totalorder %s34, %s37
      %p46 = scmp.eq.s32.totalorder %s17, 1
      %p47 = por %p45, %p46
      %p48 = scmp.ne.s32.totalorder %s37, %s38
      %p49 = scmp.eq.s32.totalorder %s17, 0
      %p50 = por %p48, %p49
      %p51 = scmp.ne.s32.totalorder %s37, %s38
      %p52 = scmp.eq.s32.totalorder %s18, 1
      %p53 = por %p51, %p52
      %p55 = scmp.ne.s32.totalorder %s38, %s54
      %p56 = scmp.eq.s32.totalorder %s18, 0
      %p57 = por %p55, %p56
      %s59 = sadd.s32 %s58, 1
      %p62 = scmp.eq.s32.totalorder %s12, 1
      %p63 = scmp.ne.s32.totalorder %s58, %s60
      %p64 = scmp.eq.s32.totalorder %s12, 0
      %p65 = por %p63, %p64
      %p66 = scmp.ne.s32.totalorder %s58, %s60
      %p67 = scmp.eq.s32.totalorder %s17, 1
      %p68 = por %p66, %p67
      %p69 = scmp.ne.s32.totalorder %s60, %s61
      %p70 = scmp.eq.s32.totalorder %s17, 0
      %p71 = por %p69, %p70
      %p72 = scmp.ne.s32.totalorder %s60, %s61
      %p73 = scmp.eq.s32.totalorder %s18, 1
      %p74 = por %p72, %p73
      %p76 = scmp.ne.s32.totalorder %s61, %s75
      %p77 = scmp.eq.s32.totalorder %s18, 0
      %p78 = por %p76, %p77
      %s80 = sadd.s32 %s79, 1
      %p83 = scmp.eq.s32.totalorder %s12, 1
      %p84 = scmp.ne.s32.totalorder %s79, %s81
      %p85 = scmp.eq.s32.totalorder %s12, 0
      %p86 = por %p84, %p85
      %p87 = scmp.ne.s32.totalorder %s79, %s81
      %p88 = scmp.eq.s32.totalorder %s17, 1
      %p89 = por %p87, %p88
      %p90 = scmp.ne.s32.totalorder %s81, %s82
      %p91 = scmp.eq.s32.totalorder %s17, 0
      %p92 = por %p90, %p91
      %p93 = scmp.ne.s32.totalorder %s81, %s82
      %p94 = scmp.eq.s32.totalorder %s18, 1
      %p95 = por %p93, %p94
      %p97 = scmp.ne.s32.totalorder %s82, %s96
      %p98 = scmp.eq.s32.totalorder %s18, 0
      %p99 = por %p97, %p98
      %s100 = ssub.s32 %s19, %s31
      %s101 = ssub.s32 %s20, %s27
      %s102 = sor.u32 %s100, %s101
      %p103 = scmp.eq.s32.totalorder %s102, 0
      %s105 = sadd.s32 %s104, 1
      %s106 = scalar_select %p103, %s104, %s105
      %p109 = pneg %p103
      %p110 = scmp.eq.s32.totalorder %s12, 1
      %p111 = por %p109, %p110
      %p112 = scmp.ne.s32.totalorder %s104, %s107
      %p113 = scmp.eq.s32.totalorder %s12, 0
      %p114 = por %p112, %p113
      %p115 = scmp.ne.s32.totalorder %s104, %s107
      %p116 = scmp.eq.s32.totalorder %s17, 1
      %p117 = por %p115, %p116
      %p118 = scmp.ne.s32.totalorder %s107, %s108
      %p119 = scmp.eq.s32.totalorder %s17, 0
      %p120 = por %p118, %p119
      %p121 = scmp.ne.s32.totalorder %s107, %s108
      %p122 = scmp.eq.s32.totalorder %s18, 1
      %p123 = por %p121, %p122
      %p125 = scmp.ne.s32.totalorder %s108, %s124
      %p126 = scmp.eq.s32.totalorder %s18, 0
      %p127 = por %p125, %p126
      %p128 = scmp.le.s32.totalorder 1, %s12
      %p129 = scmp.lt.s32.totalorder %s12, 3
      %p130 = pnand %p128, %p129
      %p131 = pneg %p130
      // Predicated region
      $region9: #{tpu_custom_call.1} parent=5 // pred_check
        _
      $region10: #{tpu_custom_call.1} parent=5 // pred_check_branch
        %133 = sbr.rel (%p130) target = $region12
      $region11: #{tpu_custom_call.1} parent=5 // pred_region
        %s134 = ssub.s32 %s12, 1
        // Predicated region
        $region13: #{tpu_custom_call.1} parent=11 // pred_check
          %p135 = pneg %p71
        $region14: #{tpu_custom_call.1} parent=11 // pred_check_branch
          %137 = sbr.rel (%p135) target = $region16
        $region15: #{tpu_custom_call.1} parent=11 // pred_region
          _
        $region16: #{tpu_custom_call.1} parent=11 // pred_fallthru
          _
        // Predicated region
        $region17: #{tpu_custom_call.1} parent=11 // pred_check
          %p138 = pneg %p92
        $region18: #{tpu_custom_call.1} parent=11 // pred_check_branch
          %140 = sbr.rel (%p138) target = $region20
        $region19: #{tpu_custom_call.1} parent=11 // pred_region
          _
        $region20: #{tpu_custom_call.1} parent=11 // pred_fallthru
          _
      $region12: #{tpu_custom_call.1} parent=5 // pred_fallthru
        _
      %p141 = scmp.lt.s32.totalorder %s12, 2
      // Predicated region
      $region21: #{tpu_custom_call.1} parent=5 // pred_check
        %p142 = pneg %p141
      $region22: #{tpu_custom_call.1} parent=5 // pred_check_branch
        %144 = sbr.rel (%p142) target = $region24
      $region23: #{tpu_custom_call.1} parent=5 // pred_region
        // Predicated region
        $region25: #{tpu_custom_call.1} parent=23 // pred_check
          %p145 = pneg %p44
        $region26: #{tpu_custom_call.1} parent=23 // pred_check_branch
          %147 = sbr.rel (%p145) target = $region28
        $region27: #{tpu_custom_call.1} parent=23 // pred_region
          %p148 = scmp.lt.s32.totalorder %s19, 1
          %s149 = scalar_select %p148, %s19, 1
          %s150 = smul.addr %s149, 51
          %s151 = smul.addr %s150, 4
          %s152 = scalar_lea.vmem %s0, %s151
        $region28: #{tpu_custom_call.1} parent=23 // pred_fallthru
          _
      $region24: #{tpu_custom_call.1} parent=5 // pred_fallthru
        _
      %p153 = scmp.le.s32.totalorder 1, %s12
      %p154 = scmp.lt.s32.totalorder %s12, 3
      %p155 = pnand %p153, %p154
      %p156 = pneg %p155
      // Predicated region
      $region29: #{tpu_custom_call.1} parent=5 // pred_check
        _
      $region30: #{tpu_custom_call.1} parent=5 // pred_check_branch
        %158 = sbr.rel (%p155) target = $region32
      $region31: #{tpu_custom_call.1} parent=5 // pred_region
        %s159 = ssub.s32 %s12, 1
        %p160 = scmp.lt.s32.totalorder %s21, 1
        %s161 = scalar_select %p160, %s21, 1
        %s162 = smul.addr %s161, 51
        %s163 = smul.addr %s162, 4
        %s164 = scalar_lea.vmem %s0, %s163
        %p165 = pneg %p50
        %p166 = pneg %p47
        %p167 = pneg %p71
        %p168 = pneg %p68
        %p169 = pneg %p92
        %p170 = pneg %p89
        %p171 = pneg %p120
        %p172 = pneg %p117
        %s173 = sand.u32 %s107, 1
        %s174 = scalar_lea.sflag [#allocation3], %s173
        %s175 = sand.u32 %s107, 1
        %s176 = smul.addr %s175, 128
        %s177 = scalar_lea.vmem [#allocation2], %s176
        %p178 = scmp.lt.s32.totalorder %s21, 1
        %s179 = scalar_select %p178, %s21, 1
        %s180 = smul.addr %s179, 51
        %s181 = smul.addr %s180, 4
        %s182 = scalar_lea.vmem %s0, %s181
        %s183 = smul.u32 16, %s22
        %s185 = smul.u32 %s22, 16
        %s186 = smul.u32 %s185, 3
        %s187 = smul.addr %s186, 4
        %s188 = scalar_lea.vmem %s182, %s187
        %v189 = vld [vmem:[%s188] sm:$0xf]
        %v190 = vld [vmem:[%s188 + $0x4] sm:$0xf]
        %v191 = vld [vmem:[%s188 + $0xc] sm:$0xf]
        %v192 = vld [vmem:[%s188 + $0x10] sm:$0xf]
        %v193 = vld [vmem:[%s188 + $0x18] sm:$0xf]
        %v194 = vld [vmem:[%s188 + $0x1c] sm:$0xf]
        %v195 = vld [vmem:[%s188 + $0x24] sm:$0xf]
        %v196 = vld [vmem:[%s188 + $0x28] sm:$0xf]
        %v197 = vld [vmem:[%s188 + $0x30] sm:$0xf]
        %v198 = vld [vmem:[%s188 + $0x34] sm:$0xf]
        %v199 = vld [vmem:[%s188 + $0x3c] sm:$0xf]
        %v200 = vld [vmem:[%s188 + $0x40] sm:$0xf]
        %v201 = vld [vmem:[%s188 + $0x48] sm:$0xf]
        %v202 = vld [vmem:[%s188 + $0x4c] sm:$0xf]
        %v203 = vld [vmem:[%s188 + $0x54] sm:$0xf]
        %v204 = vld [vmem:[%s188 + $0x58] sm:$0xf]
        %v205 = vld [vmem:[%s188 + $0x60] sm:$0xf]
        %v206 = vld [vmem:[%s188 + $0x64] sm:$0xf]
        %v207 = vld [vmem:[%s188 + $0x6c] sm:$0xf]
        %v208 = vld [vmem:[%s188 + $0x70] sm:$0xf]
        %v209 = vld [vmem:[%s188 + $0x78] sm:$0xf]
        %v210 = vld [vmem:[%s188 + $0x7c] sm:$0xf]
        %v211 = vld [vmem:[%s188 + $0x84] sm:$0xf]
        %v212 = vld [vmem:[%s188 + $0x88] sm:$0xf]
        %v213 = vld [vmem:[%s188 + $0x90] sm:$0xf]
        %v214 = vld [vmem:[%s188 + $0x94] sm:$0xf]
        %v215 = vld [vmem:[%s188 + $0x9c] sm:$0xf]
        %v216 = vld [vmem:[%s188 + $0xa0] sm:$0xf]
        %v217 = vld [vmem:[%s188 + $0xa8] sm:$0xf]
        %v218 = vld [vmem:[%s188 + $0xac] sm:$0xf]
        %v219 = vld [vmem:[%s188 + $0xb4] sm:$0xf]
        %v220 = vld [vmem:[%s188 + $0xb8] sm:$0xf]
        %v221 = vld [vmem:[%s1] sm:$0xf]
        %v222 = vld [vmem:[%s1 + $0x4] sm:$0x3]
        %v223 = vld [vmem:[%s188 + $0x8] sm:$0x1]
        %v224 = vld [vmem:[%s188 + $0x14] sm:$0x1]
        %v225 = vld [vmem:[%s188 + $0x20] sm:$0x1]
        %v226 = vld [vmem:[%s188 + $0x2c] sm:$0x1]
        %v227 = vld [vmem:[%s188 + $0x38] sm:$0x1]
        %v228 = vld [vmem:[%s188 + $0x44] sm:$0x1]
        %v229 = vld [vmem:[%s188 + $0x50] sm:$0x1]
        %v230 = vld [vmem:[%s188 + $0x5c] sm:$0x1]
        %v231 = vld [vmem:[%s188 + $0x68] sm:$0x1]
        %v232 = vld [vmem:[%s188 + $0x74] sm:$0x1]
        %v233 = vld [vmem:[%s188 + $0x80] sm:$0x1]
        %v234 = vld [vmem:[%s188 + $0x8c] sm:$0x1]
        %v235 = vld [vmem:[%s188 + $0x98] sm:$0x1]
        %v236 = vld [vmem:[%s188 + $0xa4] sm:$0x1]
        %v237 = vld [vmem:[%s188 + $0xb0] sm:$0x1]
        %v238 = vld [vmem:[%s188 + $0xbc] sm:$0x1]
        %vm239 = vsmask.f32 3328
        %vm240 = vsmask.f32 7440
        %vm241 = vmor %vm239, %vm240
        %v243 = vshrl.u32 %v189, 16
        %v245 = vrot.slane %v243, 4
        %v246 = vshll.u32 %v189, 16
        %v248 = vrot.slane %v246, 5
        %v249 = vor.u32 %v245, %v248
        %v250 = vrot.slane %v249, 4
        %v252 = vshll.u32 %v190, 16
        %v254 = vrot.slane %v252, 5
        %v255 = vsel %vm241, %v250, %v254
        %v256 = vshrl.u32 %v190, 16
        %v258 = vrot.slane %v256, 4
        %v259 = vor.u32 %v258, %v254
        %v260 = vrot.slane %v259, 4
        %v262 = vshll.u32 %v223, 16
        %v264 = vrot.slane %v262, 5
        %v265 = vsel %vm241, %v260, %v264
        %v267 = vshrl.u32 %v191, 16
        %v269 = vrot.slane %v267, 4
        %v270 = vshll.u32 %v191, 16
        %v272 = vrot.slane %v270, 5
        %v273 = vor.u32 %v269, %v272
        %v274 = vrot.slane %v273, 4
        %v276 = vshll.u32 %v192, 16
        %v278 = vrot.slane %v276, 5
        %v279 = vsel %vm241, %v274, %v278
        %v280 = vshrl.u32 %v192, 16
        %v282 = vrot.slane %v280, 4
        %v283 = vor.u32 %v282, %v278
        %v284 = vrot.slane %v283, 4
        %v286 = vshll.u32 %v224, 16
        %v288 = vrot.slane %v286, 5
        %v289 = vsel %vm241, %v284, %v288
        %v291 = vshrl.u32 %v193, 16
        %v293 = vrot.slane %v291, 4
        %v294 = vshll.u32 %v193, 16
        %v296 = vrot.slane %v294, 5
        %v297 = vor.u32 %v293, %v296
        %v298 = vrot.slane %v297, 4
        %v300 = vshll.u32 %v194, 16
        %v302 = vrot.slane %v300, 5
        %v303 = vsel %vm241, %v298, %v302
        %v304 = vshrl.u32 %v194, 16
        %v306 = vrot.slane %v304, 4
        %v307 = vor.u32 %v306, %v302
        %v308 = vrot.slane %v307, 4
        %v310 = vshll.u32 %v225, 16
        %v312 = vrot.slane %v310, 5
        %v313 = vsel %vm241, %v308, %v312
        %v315 = vshrl.u32 %v195, 16
        %v317 = vrot.slane %v315, 4
        %v318 = vshll.u32 %v195, 16
        %v320 = vrot.slane %v318, 5
        %v321 = vor.u32 %v317, %v320
        %v322 = vrot.slane %v321, 4
        %v324 = vshll.u32 %v196, 16
        %v326 = vrot.slane %v324, 5
        %v327 = vsel %vm241, %v322, %v326
        %v328 = vshrl.u32 %v196, 16
        %v330 = vrot.slane %v328, 4
        %v331 = vor.u32 %v330, %v326
        %v332 = vrot.slane %v331, 4
        %v334 = vshll.u32 %v226, 16
        %v336 = vrot.slane %v334, 5
        %v337 = vsel %vm241, %v332, %v336
        %v339 = vshrl.u32 %v197, 16
        %v341 = vrot.slane %v339, 4
        %v342 = vshll.u32 %v197, 16
        %v344 = vrot.slane %v342, 5
        %v345 = vor.u32 %v341, %v344
        %v346 = vrot.slane %v345, 4
        %v348 = vshll.u32 %v198, 16
        %v350 = vrot.slane %v348, 5
        %v351 = vsel %vm241, %v346, %v350
        %v352 = vshrl.u32 %v198, 16
        %v354 = vrot.slane %v352, 4
        %v355 = vor.u32 %v354, %v350
        %v356 = vrot.slane %v355, 4
        %v358 = vshll.u32 %v227, 16
        %v360 = vrot.slane %v358, 5
        %v361 = vsel %vm241, %v356, %v360
        %v363 = vshrl.u32 %v199, 16
        %v365 = vrot.slane %v363, 4
        %v366 = vshll.u32 %v199, 16
        %v368 = vrot.slane %v366, 5
        %v369 = vor.u32 %v365, %v368
        %v370 = vrot.slane %v369, 4
        %v372 = vshll.u32 %v200, 16
        %v374 = vrot.slane %v372, 5
        %v375 = vsel %vm241, %v370, %v374
        %v376 = vshrl.u32 %v200, 16
        %v378 = vrot.slane %v376, 4
        %v379 = vor.u32 %v378, %v374
        %v380 = vrot.slane %v379, 4
        %v382 = vshll.u32 %v228, 16
        %v384 = vrot.slane %v382, 5
        %v385 = vsel %vm241, %v380, %v384
        %v387 = vshrl.u32 %v201, 16
        %v389 = vrot.slane %v387, 4
        %v390 = vshll.u32 %v201, 16
        %v392 = vrot.slane %v390, 5
        %v393 = vor.u32 %v389, %v392
        %v394 = vrot.slane %v393, 4
        %v396 = vshll.u32 %v202, 16
        %v398 = vrot.slane %v396, 5
        %v399 = vsel %vm241, %v394, %v398
        %v400 = vshrl.u32 %v202, 16
        %v402 = vrot.slane %v400, 4
        %v403 = vor.u32 %v402, %v398
        %v404 = vrot.slane %v403, 4
        %v406 = vshll.u32 %v229, 16
        %v408 = vrot.slane %v406, 5
        %v409 = vsel %vm241, %v404, %v408
        %v411 = vshrl.u32 %v203, 16
        %v413 = vrot.slane %v411, 4
        %v414 = vshll.u32 %v203, 16
        %v416 = vrot.slane %v414, 5
        %v417 = vor.u32 %v413, %v416
        %v418 = vrot.slane %v417, 4
        %v420 = vshll.u32 %v204, 16
        %v422 = vrot.slane %v420, 5
        %v423 = vsel %vm241, %v418, %v422
        %v424 = vshrl.u32 %v204, 16
        %v426 = vrot.slane %v424, 4
        %v427 = vor.u32 %v426, %v422
        %v428 = vrot.slane %v427, 4
        %v430 = vshll.u32 %v230, 16
        %v432 = vrot.slane %v430, 5
        %v433 = vsel %vm241, %v428, %v432
        %v435 = vshrl.u32 %v205, 16
        %v437 = vrot.slane %v435, 4
        %v438 = vshll.u32 %v205, 16
        %v440 = vrot.slane %v438, 5
        %v441 = vor.u32 %v437, %v440
        %v442 = vrot.slane %v441, 4
        %v444 = vshll.u32 %v206, 16
        %v446 = vrot.slane %v444, 5
        %v447 = vsel %vm241, %v442, %v446
        %v448 = vshrl.u32 %v206, 16
        %v450 = vrot.slane %v448, 4
        %v451 = vor.u32 %v450, %v446
        %v452 = vrot.slane %v451, 4
        %v454 = vshll.u32 %v231, 16
        %v456 = vrot.slane %v454, 5
        %v457 = vsel %vm241, %v452, %v456
        %v459 = vshrl.u32 %v207, 16
        %v461 = vrot.slane %v459, 4
        %v462 = vshll.u32 %v207, 16
        %v464 = vrot.slane %v462, 5
        %v465 = vor.u32 %v461, %v464
        %v466 = vrot.slane %v465, 4
        %v468 = vshll.u32 %v208, 16
        %v470 = vrot.slane %v468, 5
        %v471 = vsel %vm241, %v466, %v470
        %v472 = vshrl.u32 %v208, 16
        %v474 = vrot.slane %v472, 4
        %v475 = vor.u32 %v474, %v470
        %v476 = vrot.slane %v475, 4
        %v478 = vshll.u32 %v232, 16
        %v480 = vrot.slane %v478, 5
        %v481 = vsel %vm241, %v476, %v480
        %v483 = vshrl.u32 %v209, 16
        %v485 = vrot.slane %v483, 4
        %v486 = vshll.u32 %v209, 16
        %v488 = vrot.slane %v486, 5
        %v489 = vor.u32 %v485, %v488
        %v490 = vrot.slane %v489, 4
        %v492 = vshll.u32 %v210, 16
        %v494 = vrot.slane %v492, 5
        %v495 = vsel %vm241, %v490, %v494
        %v496 = vshrl.u32 %v210, 16
        %v498 = vrot.slane %v496, 4
        %v499 = vor.u32 %v498, %v494
        %v500 = vrot.slane %v499, 4
        %v502 = vshll.u32 %v233, 16
        %v504 = vrot.slane %v502, 5
        %v505 = vsel %vm241, %v500, %v504
        %v507 = vshrl.u32 %v211, 16
        %v509 = vrot.slane %v507, 4
        %v510 = vshll.u32 %v211, 16
        %v512 = vrot.slane %v510, 5
        %v513 = vor.u32 %v509, %v512
        %v514 = vrot.slane %v513, 4
        %v516 = vshll.u32 %v212, 16
        %v518 = vrot.slane %v516, 5
        %v519 = vsel %vm241, %v514, %v518
        %v520 = vshrl.u32 %v212, 16
        %v522 = vrot.slane %v520, 4
        %v523 = vor.u32 %v522, %v518
        %v524 = vrot.slane %v523, 4
        %v526 = vshll.u32 %v234, 16
        %v528 = vrot.slane %v526, 5
        %v529 = vsel %vm241, %v524, %v528
        %v531 = vshrl.u32 %v213, 16
        %v533 = vrot.slane %v531, 4
        %v534 = vshll.u32 %v213, 16
        %v536 = vrot.slane %v534, 5
        %v537 = vor.u32 %v533, %v536
        %v538 = vrot.slane %v537, 4
        %v540 = vshll.u32 %v214, 16
        %v542 = vrot.slane %v540, 5
        %v543 = vsel %vm241, %v538, %v542
        %v544 = vshrl.u32 %v214, 16
        %v546 = vrot.slane %v544, 4
        %v547 = vor.u32 %v546, %v542
        %v548 = vrot.slane %v547, 4
        %v550 = vshll.u32 %v235, 16
        %v552 = vrot.slane %v550, 5
        %v553 = vsel %vm241, %v548, %v552
        %v555 = vshrl.u32 %v215, 16
        %v557 = vrot.slane %v555, 4
        %v558 = vshll.u32 %v215, 16
        %v560 = vrot.slane %v558, 5
        %v561 = vor.u32 %v557, %v560
        %v562 = vrot.slane %v561, 4
        %v564 = vshll.u32 %v216, 16
        %v566 = vrot.slane %v564, 5
        %v567 = vsel %vm241, %v562, %v566
        %v568 = vshrl.u32 %v216, 16
        %v570 = vrot.slane %v568, 4
        %v571 = vor.u32 %v570, %v566
        %v572 = vrot.slane %v571, 4
        %v574 = vshll.u32 %v236, 16
        %v576 = vrot.slane %v574, 5
        %v577 = vsel %vm241, %v572, %v576
        %v579 = vshrl.u32 %v217, 16
        %v581 = vrot.slane %v579, 4
        %v582 = vshll.u32 %v217, 16
        %v584 = vrot.slane %v582, 5
        %v585 = vor.u32 %v581, %v584
        %v586 = vrot.slane %v585, 4
        %v588 = vshll.u32 %v218, 16
        %v590 = vrot.slane %v588, 5
        %v591 = vsel %vm241, %v586, %v590
        %v592 = vshrl.u32 %v218, 16
        %v594 = vrot.slane %v592, 4
        %v595 = vor.u32 %v594, %v590
        %v596 = vrot.slane %v595, 4
        %v598 = vshll.u32 %v237, 16
        %v600 = vrot.slane %v598, 5
        %v601 = vsel %vm241, %v596, %v600
        %v603 = vshrl.u32 %v219, 16
        %v605 = vrot.slane %v603, 4
        %v606 = vshll.u32 %v219, 16
        %v608 = vrot.slane %v606, 5
        %v609 = vor.u32 %v605, %v608
        %v610 = vrot.slane %v609, 4
        %v612 = vshll.u32 %v220, 16
        %v614 = vrot.slane %v612, 5
        %v615 = vsel %vm241, %v610, %v614
        %v616 = vshrl.u32 %v220, 16
        %v618 = vrot.slane %v616, 4
        %v619 = vor.u32 %v618, %v614
        %v620 = vrot.slane %v619, 4
        %v622 = vshll.u32 %v238, 16
        %v624 = vrot.slane %v622, 5
        %v625 = vsel %vm241, %v620, %v624
        %s626 = scalar_lea.vmem %s1, 8
        %v627 = vld [vmem:[%s626] sm:$0xf]
        %v628 = vld [vmem:[%s626 + $0x4] sm:$0x3]
        %v629 = vunpack.c.l.b16 %v255
        %v630 = vunpack.c.l.b16 %v265
        %v631 = vunpack.c.l.b16 %v279
        %v632 = vunpack.c.l.b16 %v289
        %v633 = vunpack.c.l.b16 %v303
        %v634 = vunpack.c.l.b16 %v313
        %v635 = vunpack.c.l.b16 %v327
        %v636 = vunpack.c.l.b16 %v337
        %v637 = vunpack.c.l.b16 %v351
        %v638 = vunpack.c.l.b16 %v361
        %v639 = vunpack.c.l.b16 %v375
        %v640 = vunpack.c.l.b16 %v385
        %v641 = vunpack.c.l.b16 %v399
        %v642 = vunpack.c.l.b16 %v409
        %v643 = vunpack.c.l.b16 %v423
        %v644 = vunpack.c.l.b16 %v433
        %v645 = vunpack.c.l.b16 %v447
        %v646 = vunpack.c.l.b16 %v457
        %v647 = vunpack.c.l.b16 %v471
        %v648 = vunpack.c.l.b16 %v481
        %v649 = vunpack.c.l.b16 %v495
        %v650 = vunpack.c.l.b16 %v505
        %v651 = vunpack.c.l.b16 %v519
        %v652 = vunpack.c.l.b16 %v529
        %v653 = vunpack.c.l.b16 %v543
        %v654 = vunpack.c.l.b16 %v553
        %v655 = vunpack.c.l.b16 %v567
        %v656 = vunpack.c.l.b16 %v577
        %v657 = vunpack.c.l.b16 %v591
        %v658 = vunpack.c.l.b16 %v601
        %v659 = vunpack.c.l.b16 %v615
        %v660 = vunpack.c.l.b16 %v625
        %v661 = vpack.c.b16 %v630, %v629
        %v662 = vpack.c.b16 %v632, %v631
        %v663 = vpack.c.b16 %v634, %v633
        %v664 = vpack.c.b16 %v636, %v635
        %v665 = vpack.c.b16 %v638, %v637
        %v666 = vpack.c.b16 %v640, %v639
        %v667 = vpack.c.b16 %v642, %v641
        %v668 = vpack.c.b16 %v644, %v643
        %v669 = vpack.c.b16 %v646, %v645
        %v670 = vpack.c.b16 %v648, %v647
        %v671 = vpack.c.b16 %v650, %v649
        %v672 = vpack.c.b16 %v652, %v651
        %v673 = vpack.c.b16 %v654, %v653
        %v674 = vpack.c.b16 %v656, %v655
        %v675 = vpack.c.b16 %v658, %v657
        %v676 = vpack.c.b16 %v660, %v659
        %v679 = vunpack.c.l.b16 %v627
        %v680 = vunpack.c.l.b16 %v628
        %v681 = vpack.c.b16 %v680, %v679
        %vm682 = vcmask 97280
        %v684 = vsel %vm682, %v661, 0
        %v687 = vsel %vm682, %v662, 0
        %v690 = vsel %vm682, %v663, 0
        %v693 = vsel %vm682, %v664, 0
        %v696 = vsel %vm682, %v665, 0
        %v699 = vsel %vm682, %v666, 0
        %v702 = vsel %vm682, %v667, 0
        %v705 = vsel %vm682, %v668, 0
        %v708 = vsel %vm682, %v669, 0
        %v711 = vsel %vm682, %v670, 0
        %v714 = vsel %vm682, %v671, 0
        %v717 = vsel %vm682, %v672, 0
        %v720 = vsel %vm682, %v673, 0
        %v723 = vsel %vm682, %v674, 0
        %v726 = vsel %vm682, %v675, 0
        %v729 = vsel %vm682, %v676, 0
        %vm731 = vcmask 1045504
        %v733 = vsel %vm731, %v681, 0
        %735 = vmatprep.subr.bf16.mxu0 0
        %736 = vmatpush1.bf16.msra.mxu0 %v733
        %737 = vmatprep.subr.bf16.mxu0 0
        %738 = vmatpush1.bf16.msra.mxu0 0
        %739 = vmatprep.subr.bf16.mxu0 0
        %740 = vmatpush1.bf16.msra.mxu0 0
        %741 = vmatprep.subr.bf16.mxu0 0
        %742 = vmatpush1.bf16.msra.mxu0 0
        %743 = vmatprep.subr.bf16.mxu0 0
        %744 = vmatpush1.bf16.msra.mxu0 0
        %745 = vmatprep.subr.bf16.mxu0 0
        %746 = vmatpush1.bf16.msra.mxu0 0
        %747 = vmatprep.subr.bf16.mxu0 0
        %748 = vmatpush1.bf16.msra.mxu0 0
        %749 = vmatprep.subr.bf16.mxu0 0
        %750 = vmatpush1.bf16.msra.mxu0 0
        %751 = vmatprep.subr.bf16.mxu0 0
        %752 = vmatpush1.bf16.msra.mxu0 0
        %753 = vmatprep.subr.bf16.mxu0 0
        %754 = vmatpush1.bf16.msra.mxu0 0
        %755 = vmatprep.subr.bf16.mxu0 0
        %756 = vmatpush1.bf16.msra.mxu0 0
        %757 = vmatprep.subr.bf16.mxu0 0
        %758 = vmatpush1.bf16.msra.mxu0 0
        %759 = vmatprep.subr.bf16.mxu0 0
        %760 = vmatpush1.bf16.msra.mxu0 0
        %761 = vmatprep.subr.bf16.mxu0 0
        %762 = vmatpush1.bf16.msra.mxu0 0
        %763 = vmatprep.subr.bf16.mxu0 0
        %764 = vmatpush1.bf16.msra.mxu0 0
        %765 = vmatprep.subr.bf16.mxu0 0
        %766 = vmatpush1.bf16.msra.mxu0 0
        %767 = vmatprep.mubr.bf16.mxu0 0
        %768 = vmatmul.mubr.bf16.gmra.mrb[0].mxu0 %v684
        %v769 = vpop.f32.mrb[0].mxu0
        %v770 = vadd.f32 0.0, %v769
        %v771 = vpop.f32.mrb[0].mxu0
        %v772 = vpop.f32.mrb[0].mxu0
        %v773 = vadd.f32 0.0, %v772
        %v774 = vpop.f32.mrb[0].mxu0
        %775 = vmatprep.mubr.bf16.mxu0 0
        %776 = vmatmul.mubr.bf16.gmra.mrb[0].mxu0 %v687
        %v777 = vpop.f32.mrb[0].mxu0
        %v778 = vadd.f32 0.0, %v777
        %v779 = vpop.f32.mrb[0].mxu0
        %v780 = vpop.f32.mrb[0].mxu0
        %v781 = vadd.f32 0.0, %v780
        %v782 = vpop.f32.mrb[0].mxu0
        %783 = vmatprep.mubr.bf16.mxu0 0
        %784 = vmatmul.mubr.bf16.gmra.mrb[0].mxu0 %v690
        %v785 = vpop.f32.mrb[0].mxu0
        %v786 = vadd.f32 0.0, %v785
        %v787 = vpop.f32.mrb[0].mxu0
        %v788 = vpop.f32.mrb[0].mxu0
        %v789 = vadd.f32 0.0, %v788
        %v790 = vpop.f32.mrb[0].mxu0
        %791 = vmatprep.mubr.bf16.mxu0 0
        %792 = vmatmul.mubr.bf16.gmra.mrb[0].mxu0 %v693
        %v793 = vpop.f32.mrb[0].mxu0
        %v794 = vadd.f32 0.0, %v793
        %v795 = vpop.f32.mrb[0].mxu0
        %v796 = vpop.f32.mrb[0].mxu0
        %v797 = vadd.f32 0.0, %v796
        %v798 = vpop.f32.mrb[0].mxu0
        %799 = vmatprep.mubr.bf16.mxu0 0
        %800 = vmatmul.mubr.bf16.gmra.mrb[0].mxu0 %v696
        %v801 = vpop.f32.mrb[0].mxu0
        %v802 = vadd.f32 0.0, %v801
        %v803 = vpop.f32.mrb[0].mxu0
        %v804 = vpop.f32.mrb[0].mxu0
        %v805 = vadd.f32 0.0, %v804
        %v806 = vpop.f32.mrb[0].mxu0
        %807 = vmatprep.mubr.bf16.mxu0 0
        %808 = vmatmul.mubr.bf16.gmra.mrb[0].mxu0 %v699
        %v809 = vpop.f32.mrb[0].mxu0
        %v810 = vadd.f32 0.0, %v809
        %v811 = vpop.f32.mrb[0].mxu0
        %v812 = vpop.f32.mrb[0].mxu0
        %v813 = vadd.f32 0.0, %v812
        %v814 = vpop.f32.mrb[0].mxu0
        %815 = vmatprep.mubr.bf16.mxu0 0
        %816 = vmatmul.mubr.bf16.gmra.mrb[0].mxu0 %v702
        %v817 = vpop.f32.mrb[0].mxu0
        %v818 = vadd.f32 0.0, %v817
        %v819 = vpop.f32.mrb[0].mxu0
        %v820 = vpop.f32.mrb[0].mxu0
        %v821 = vadd.f32 0.0, %v820
        %v822 = vpop.f32.mrb[0].mxu0
        %823 = vmatprep.mubr.bf16.mxu0 0
        %824 = vmatmul.mubr.bf16.gmra.mrb[0].mxu0 %v705
        %v825 = vpop.f32.mrb[0].mxu0
        %v826 = vadd.f32 0.0, %v825
        %v827 = vpop.f32.mrb[0].mxu0
        %v828 = vpop.f32.mrb[0].mxu0
        %v829 = vadd.f32 0.0, %v828
        %v830 = vpop.f32.mrb[0].mxu0
        %831 = vmatprep.mubr.bf16.mxu0 0
        %832 = vmatmul.mubr.bf16.gmra.mrb[0].mxu0 %v708
        %v833 = vpop.f32.mrb[0].mxu0
        %v834 = vadd.f32 0.0, %v833
        %v835 = vpop.f32.mrb[0].mxu0
        %v836 = vpop.f32.mrb[0].mxu0
        %v837 = vadd.f32 0.0, %v836
        %v838 = vpop.f32.mrb[0].mxu0
        %839 = vmatprep.mubr.bf16.mxu0 0
        %840 = vmatmul.mubr.bf16.gmra.mrb[0].mxu0 %v711
        %v841 = vpop.f32.mrb[0].mxu0
        %v842 = vadd.f32 0.0, %v841
        %v843 = vpop.f32.mrb[0].mxu0
        %v844 = vpop.f32.mrb[0].mxu0
        %v845 = vadd.f32 0.0, %v844
        %v846 = vpop.f32.mrb[0].mxu0
        %847 = vmatprep.mubr.bf16.mxu0 0
        %848 = vmatmul.mubr.bf16.gmra.mrb[0].mxu0 %v714
        %v849 = vpop.f32.mrb[0].mxu0
        %v850 = vadd.f32 0.0, %v849
        %v851 = vpop.f32.mrb[0].mxu0
        %v852 = vpop.f32.mrb[0].mxu0
        %v853 = vadd.f32 0.0, %v852
        %v854 = vpop.f32.mrb[0].mxu0
        %855 = vmatprep.mubr.bf16.mxu0 0
        %856 = vmatmul.mubr.bf16.gmra.mrb[0].mxu0 %v717
        %v857 = vpop.f32.mrb[0].mxu0
        %v858 = vadd.f32 0.0, %v857
        %v859 = vpop.f32.mrb[0].mxu0
        %v860 = vpop.f32.mrb[0].mxu0
        %v861 = vadd.f32 0.0, %v860
        %v862 = vpop.f32.mrb[0].mxu0
        %863 = vmatprep.mubr.bf16.mxu0 0
        %864 = vmatmul.mubr.bf16.gmra.mrb[0].mxu0 %v720
        %v865 = vpop.f32.mrb[0].mxu0
        %v866 = vadd.f32 0.0, %v865
        %v867 = vpop.f32.mrb[0].mxu0
        %v868 = vpop.f32.mrb[0].mxu0
        %v869 = vadd.f32 0.0, %v868
        %v870 = vpop.f32.mrb[0].mxu0
        %871 = vmatprep.mubr.bf16.mxu0 0
        %872 = vmatmul.mubr.bf16.gmra.mrb[0].mxu0 %v723
        %v873 = vpop.f32.mrb[0].mxu0
        %v874 = vadd.f32 0.0, %v873
        %v875 = vpop.f32.mrb[0].mxu0
        %v876 = vpop.f32.mrb[0].mxu0
        %v877 = vadd.f32 0.0, %v876
        %v878 = vpop.f32.mrb[0].mxu0
        %879 = vmatprep.mubr.bf16.mxu0 0
        %880 = vmatmul.mubr.bf16.gmra.mrb[0].mxu0 %v726
        %v881 = vpop.f32.mrb[0].mxu0
        %v882 = vadd.f32 0.0, %v881
        %v883 = vpop.f32.mrb[0].mxu0
        %v884 = vpop.f32.mrb[0].mxu0
        %v885 = vadd.f32 0.0, %v884
        %v886 = vpop.f32.mrb[0].mxu0
        %887 = vmatprep.mubr.bf16.mxu0 0
        %888 = vmatmul.mubr.bf16.gmra.mrb[0].mxu0 %v729
        %v889 = vpop.f32.mrb[0].mxu0
        %v890 = vadd.f32 0.0, %v889
        %v891 = vpop.f32.mrb[0].mxu0
        %v892 = vpop.f32.mrb[0].mxu0
        %v893 = vadd.f32 0.0, %v892
        %v894 = vpop.f32.mrb[0].mxu0
        %895 = vdwg.mxu0
        %v928 = vunpack.c.l.b16 %v189
        %v929 = vunpack.c.l.b16 %v190
        %v930 = vunpack.c.l.b16 %v191
        %v931 = vunpack.c.l.b16 %v192
        %v932 = vunpack.c.l.b16 %v193
        %v933 = vunpack.c.l.b16 %v194
        %v934 = vunpack.c.l.b16 %v195
        %v935 = vunpack.c.l.b16 %v196
        %v936 = vunpack.c.l.b16 %v197
        %v937 = vunpack.c.l.b16 %v198
        %v938 = vunpack.c.l.b16 %v199
        %v939 = vunpack.c.l.b16 %v200
        %v940 = vunpack.c.l.b16 %v201
        %v941 = vunpack.c.l.b16 %v202
        %v942 = vunpack.c.l.b16 %v203
        %v943 = vunpack.c.l.b16 %v204
        %v944 = vunpack.c.l.b16 %v205
        %v945 = vunpack.c.l.b16 %v206
        %v946 = vunpack.c.l.b16 %v207
        %v947 = vunpack.c.l.b16 %v208
        %v948 = vunpack.c.l.b16 %v209
        %v949 = vunpack.c.l.b16 %v210
        %v950 = vunpack.c.l.b16 %v211
        %v951 = vunpack.c.l.b16 %v212
        %v952 = vunpack.c.l.b16 %v213
        %v953 = vunpack.c.l.b16 %v214
        %v954 = vunpack.c.l.b16 %v215
        %v955 = vunpack.c.l.b16 %v216
        %v956 = vunpack.c.l.b16 %v217
        %v957 = vunpack.c.l.b16 %v218
        %v958 = vunpack.c.l.b16 %v219
        %v959 = vunpack.c.l.b16 %v220
        %v960 = vpack.c.b16 %v929, %v928
        %v961 = vpack.c.b16 %v931, %v930
        %v962 = vpack.c.b16 %v933, %v932
        %v963 = vpack.c.b16 %v935, %v934
        %v964 = vpack.c.b16 %v937, %v936
        %v965 = vpack.c.b16 %v939, %v938
        %v966 = vpack.c.b16 %v941, %v940
        %v967 = vpack.c.b16 %v943, %v942
        %v968 = vpack.c.b16 %v945, %v944
        %v969 = vpack.c.b16 %v947, %v946
        %v970 = vpack.c.b16 %v949, %v948
        %v971 = vpack.c.b16 %v951, %v950
        %v972 = vpack.c.b16 %v953, %v952
        %v973 = vpack.c.b16 %v955, %v954
        %v974 = vpack.c.b16 %v957, %v956
        %v975 = vpack.c.b16 %v959, %v958
        %v978 = vunpack.c.l.b16 %v221
        %v979 = vunpack.c.l.b16 %v222
        %v980 = vpack.c.b16 %v979, %v978
        %v982 = vsel %vm682, %v960, 0
        %v985 = vsel %vm682, %v961, 0
        %v988 = vsel %vm682, %v962, 0
        %v991 = vsel %vm682, %v963, 0
        %v994 = vsel %vm682, %v964, 0
        %v997 = vsel %vm682, %v965, 0
        %v1000 = vsel %vm682, %v966, 0
        %v1003 = vsel %vm682, %v967, 0
        %v1006 = vsel %vm682, %v968, 0
        %v1009 = vsel %vm682, %v969, 0
        %v1012 = vsel %vm682, %v970, 0
        %v1015 = vsel %vm682, %v971, 0
        %v1018 = vsel %vm682, %v972, 0
        %v1021 = vsel %vm682, %v973, 0
        %v1024 = vsel %vm682, %v974, 0
        %v1027 = vsel %vm682, %v975, 0
        %v1030 = vsel %vm731, %v980, 0
        %1032 = vmatprep.subr.bf16.mxu0 0
        %1033 = vmatpush1.bf16.msra.mxu0 %v1030
        %1034 = vmatprep.subr.bf16.mxu0 0
        %1035 = vmatpush1.bf16.msra.mxu0 0
        %1036 = vmatprep.subr.bf16.mxu0 0
        %1037 = vmatpush1.bf16.msra.mxu0 0
        %1038 = vmatprep.subr.bf16.mxu0 0
        %1039 = vmatpush1.bf16.msra.mxu0 0
        %1040 = vmatprep.subr.bf16.mxu0 0
        %1041 = vmatpush1.bf16.msra.mxu0 0
        %1042 = vmatprep.subr.bf16.mxu0 0
        %1043 = vmatpush1.bf16.msra.mxu0 0
        %1044 = vmatprep.subr.bf16.mxu0 0
        %1045 = vmatpush1.bf16.msra.mxu0 0
        %1046 = vmatprep.subr.bf16.mxu0 0
        %1047 = vmatpush1.bf16.msra.mxu0 0
        %1048 = vmatprep.subr.bf16.mxu0 0
        %1049 = vmatpush1.bf16.msra.mxu0 0
        %1050 = vmatprep.subr.bf16.mxu0 0
        %1051 = vmatpush1.bf16.msra.mxu0 0
        %1052 = vmatprep.subr.bf16.mxu0 0
        %1053 = vmatpush1.bf16.msra.mxu0 0
        %1054 = vmatprep.subr.bf16.mxu0 0
        %1055 = vmatpush1.bf16.msra.mxu0 0
        %1056 = vmatprep.subr.bf16.mxu0 0
        %1057 = vmatpush1.bf16.msra.mxu0 0
        %1058 = vmatprep.subr.bf16.mxu0 0
        %1059 = vmatpush1.bf16.msra.mxu0 0
        %1060 = vmatprep.subr.bf16.mxu0 0
        %1061 = vmatpush1.bf16.msra.mxu0 0
        %1062 = vmatprep.subr.bf16.mxu0 0
        %1063 = vmatpush1.bf16.msra.mxu0 0
        %1064 = vmatprep.mubr.bf16.mxu0 0
        %1065 = vmatmul.mubr.bf16.gmra.mrb[0].mxu0 %v982
        %v1066 = vpop.f32.mrb[0].mxu0
        %v1067 = vadd.f32 %v770, %v1066
        %v1068 = vpop.f32.mrb[0].mxu0
        %v1069 = vpop.f32.mrb[0].mxu0
        %v1070 = vadd.f32 %v773, %v1069
        %v1071 = vpop.f32.mrb[0].mxu0
        %1072 = vmatprep.mubr.bf16.mxu0 0
        %1073 = vmatmul.mubr.bf16.gmra.mrb[0].mxu0 %v985
        %v1074 = vpop.f32.mrb[0].mxu0
        %v1075 = vadd.f32 %v778, %v1074
        %v1076 = vpop.f32.mrb[0].mxu0
        %v1077 = vpop.f32.mrb[0].mxu0
        %v1078 = vadd.f32 %v781, %v1077
        %v1079 = vpop.f32.mrb[0].mxu0
        %1080 = vmatprep.mubr.bf16.mxu0 0
        %1081 = vmatmul.mubr.bf16.gmra.mrb[0].mxu0 %v988
        %v1082 = vpop.f32.mrb[0].mxu0
        %v1083 = vadd.f32 %v786, %v1082
        %v1084 = vpop.f32.mrb[0].mxu0
        %v1085 = vpop.f32.mrb[0].mxu0
        %v1086 = vadd.f32 %v789, %v1085
        %v1087 = vpop.f32.mrb[0].mxu0
        %1088 = vmatprep.mubr.bf16.mxu0 0
        %1089 = vmatmul.mubr.bf16.gmra.mrb[0].mxu0 %v991
        %v1090 = vpop.f32.mrb[0].mxu0
        %v1091 = vadd.f32 %v794, %v1090
        %v1092 = vpop.f32.mrb[0].mxu0
        %v1093 = vpop.f32.mrb[0].mxu0
        %v1094 = vadd.f32 %v797, %v1093
        %v1095 = vpop.f32.mrb[0].mxu0
        %1096 = vmatprep.mubr.bf16.mxu0 0
        %1097 = vmatmul.mubr.bf16.gmra.mrb[0].mxu0 %v994
        %v1098 = vpop.f32.mrb[0].mxu0
        %v1099 = vadd.f32 %v802, %v1098
        %v1100 = vpop.f32.mrb[0].mxu0
        %v1101 = vpop.f32.mrb[0].mxu0
        %v1102 = vadd.f32 %v805, %v1101
        %v1103 = vpop.f32.mrb[0].mxu0
        %1104 = vmatprep.mubr.bf16.mxu0 0
        %1105 = vmatmul.mubr.bf16.gmra.mrb[0].mxu0 %v997
        %v1106 = vpop.f32.mrb[0].mxu0
        %v1107 = vadd.f32 %v810, %v1106
        %v1108 = vpop.f32.mrb[0].mxu0
        %v1109 = vpop.f32.mrb[0].mxu0
        %v1110 = vadd.f32 %v813, %v1109
        %v1111 = vpop.f32.mrb[0].mxu0
        %1112 = vmatprep.mubr.bf16.mxu0 0
        %1113 = vmatmul.mubr.bf16.gmra.mrb[0].mxu0 %v1000
        %v1114 = vpop.f32.mrb[0].mxu0
        %v1115 = vadd.f32 %v818, %v1114
        %v1116 = vpop.f32.mrb[0].mxu0
        %v1117 = vpop.f32.mrb[0].mxu0
        %v1118 = vadd.f32 %v821, %v1117
        %v1119 = vpop.f32.mrb[0].mxu0
        %1120 = vmatprep.mubr.bf16.mxu0 0
        %1121 = vmatmul.mubr.bf16.gmra.mrb[0].mxu0 %v1003
        %v1122 = vpop.f32.mrb[0].mxu0
        %v1123 = vadd.f32 %v826, %v1122
        %v1124 = vpop.f32.mrb[0].mxu0
        %v1125 = vpop.f32.mrb[0].mxu0
        %v1126 = vadd.f32 %v829, %v1125
        %v1127 = vpop.f32.mrb[0].mxu0
        %1128 = vmatprep.mubr.bf16.mxu0 0
        %1129 = vmatmul.mubr.bf16.gmra.mrb[0].mxu0 %v1006
        %v1130 = vpop.f32.mrb[0].mxu0
        %v1131 = vadd.f32 %v834, %v1130
        %v1132 = vpop.f32.mrb[0].mxu0
        %v1133 = vpop.f32.mrb[0].mxu0
        %v1134 = vadd.f32 %v837, %v1133
        %v1135 = vpop.f32.mrb[0].mxu0
        %1136 = vmatprep.mubr.bf16.mxu0 0
        %1137 = vmatmul.mubr.bf16.gmra.mrb[0].mxu0 %v1009
        %v1138 = vpop.f32.mrb[0].mxu0
        %v1139 = vadd.f32 %v842, %v1138
        %v1140 = vpop.f32.mrb[0].mxu0
        %v1141 = vpop.f32.mrb[0].mxu0
        %v1142 = vadd.f32 %v845, %v1141
        %v1143 = vpop.f32.mrb[0].mxu0
        %1144 = vmatprep.mubr.bf16.mxu0 0
        %1145 = vmatmul.mubr.bf16.gmra.mrb[0].mxu0 %v1012
        %v1146 = vpop.f32.mrb[0].mxu0
        %v1147 = vadd.f32 %v850, %v1146
        %v1148 = vpop.f32.mrb[0].mxu0
        %v1149 = vpop.f32.mrb[0].mxu0
        %v1150 = vadd.f32 %v853, %v1149
        %v1151 = vpop.f32.mrb[0].mxu0
        %1152 = vmatprep.mubr.bf16.mxu0 0
        %1153 = vmatmul.mubr.bf16.gmra.mrb[0].mxu0 %v1015
        %v1154 = vpop.f32.mrb[0].mxu0
        %v1155 = vadd.f32 %v858, %v1154
        %v1156 = vpop.f32.mrb[0].mxu0
        %v1157 = vpop.f32.mrb[0].mxu0
        %v1158 = vadd.f32 %v861, %v1157
        %v1159 = vpop.f32.mrb[0].mxu0
        %1160 = vmatprep.mubr.bf16.mxu0 0
        %1161 = vmatmul.mubr.bf16.gmra.mrb[0].mxu0 %v1018
        %v1162 = vpop.f32.mrb[0].mxu0
        %v1163 = vadd.f32 %v866, %v1162
        %v1164 = vpop.f32.mrb[0].mxu0
        %v1165 = vpop.f32.mrb[0].mxu0
        %v1166 = vadd.f32 %v869, %v1165
        %v1167 = vpop.f32.mrb[0].mxu0
        %1168 = vmatprep.mubr.bf16.mxu0 0
        %1169 = vmatmul.mubr.bf16.gmra.mrb[0].mxu0 %v1021
        %v1170 = vpop.f32.mrb[0].mxu0
        %v1171 = vadd.f32 %v874, %v1170
        %v1172 = vpop.f32.mrb[0].mxu0
        %v1173 = vpop.f32.mrb[0].mxu0
        %v1174 = vadd.f32 %v877, %v1173
        %v1175 = vpop.f32.mrb[0].mxu0
        %1176 = vmatprep.mubr.bf16.mxu0 0
        %1177 = vmatmul.mubr.bf16.gmra.mrb[0].mxu0 %v1024
        %v1178 = vpop.f32.mrb[0].mxu0
        %v1179 = vadd.f32 %v882, %v1178
        %v1180 = vpop.f32.mrb[0].mxu0
        %v1181 = vpop.f32.mrb[0].mxu0
        %v1182 = vadd.f32 %v885, %v1181
        %v1183 = vpop.f32.mrb[0].mxu0
        %1184 = vmatprep.mubr.bf16.mxu0 0
        %1185 = vmatmul.mubr.bf16.gmra.mrb[0].mxu0 %v1027
        %v1186 = vpop.f32.mrb[0].mxu0
        %v1187 = vadd.f32 %v890, %v1186
        %v1188 = vpop.f32.mrb[0].mxu0
        %v1189 = vpop.f32.mrb[0].mxu0
        %v1190 = vadd.f32 %v893, %v1189
        %v1191 = vpop.f32.mrb[0].mxu0
        %1192 = vdwg.mxu0
        %s1193 = sadd.s32 %s185, 1
        %s1194 = smul.u32 %s1193, 3
        %s1195 = smul.addr %s1194, 4
        %s1196 = scalar_lea.vmem %s182, %s1195
        %v1197 = vld [vmem:[%s1196] sm:$0xf]
        %v1198 = vld [vmem:[%s1196 + $0x4] sm:$0xf]
        %v1199 = vld [vmem:[%s1196 + $0xc] sm:$0xf]
        %v1200 = vld [vmem:[%s1196 + $0x10] sm:$0xf]
        %v1201 = vld [vmem:[%s1196 + $0x18] sm:$0xf]
        %v1202 = vld [vmem:[%s1196 + $0x1c] sm:$0xf]
        %v1203 = vld [vmem:[%s1196 + $0x24] sm:$0xf]
        %v1204 = vld [vmem:[%s1196 + $0x28] sm:$0xf]
        %v1205 = vld [vmem:[%s1196 + $0x30] sm:$0xf]
        %v1206 = vld [vmem:[%s1196 + $0x34] sm:$0xf]
        %v1207 = vld [vmem:[%s1196 + $0x3c] sm:$0xf]
        %v1208 = vld [vmem:[%s1196 + $0x40] sm:$0xf]
        %v1209 = vld [vmem:[%s1196 + $0x48] sm:$0xf]
        %v1210 = vld [vmem:[%s1196 + $0x4c] sm:$0xf]
        %v1211 = vld [vmem:[%s1196 + $0x54] sm:$0xf]
        %v1212 = vld [vmem:[%s1196 + $0x58] sm:$0xf]
        %v1213 = vld [vmem:[%s1196 + $0x60] sm:$0xf]
        %v1214 = vld [vmem:[%s1196 + $0x64] sm:$0xf]
        %v1215 = vld [vmem:[%s1196 + $0x6c] sm:$0xf]
        %v1216 = vld [vmem:[%s1196 + $0x70] sm:$0xf]
        %v1217 = vld [vmem:[%s1196 + $0x78] sm:$0xf]
        %v1218 = vld [vmem:[%s1196 + $0x7c] sm:$0xf]
        %v1219 = vld [vmem:[%s1196 + $0x84] sm:$0xf]
        %v1220 = vld [vmem:[%s1196 + $0x88] sm:$0xf]
        %v1221 = vld [vmem:[%s1196 + $0x90] sm:$0xf]
        %v1222 = vld [vmem:[%s1196 + $0x94] sm:$0xf]
        %v1223 = vld [vmem:[%s1196 + $0x9c] sm:$0xf]
        %v1224 = vld [vmem:[%s1196 + $0xa0] sm:$0xf]
        %v1225 = vld [vmem:[%s1196 + $0xa8] sm:$0xf]
        %v1226 = vld [vmem:[%s1196 + $0xac] sm:$0xf]
        %v1227 = vld [vmem:[%s1196 + $0xb4] sm:$0xf]
        %v1228 = vld [vmem:[%s1196 + $0xb8] sm:$0xf]
        %s1229 = scalar_lea.vmem %s1, 16
        %v1230 = vld [vmem:[%s1229] sm:$0xf]
        %v1231 = vld [vmem:[%s1229 + $0x4] sm:$0x3]
        %v1264 = vunpack.c.l.b16 %v1197
        %v1265 = vunpack.c.l.b16 %v1198
        %v1266 = vunpack.c.l.b16 %v1199
        %v1267 = vunpack.c.l.b16 %v1200
        %v1268 = vunpack.c.l.b16 %v1201
        %v1269 = vunpack.c.l.b16 %v1202
        %v1270 = vunpack.c.l.b16 %v1203
        %v1271 = vunpack.c.l.b16 %v1204
        %v1272 = vunpack.c.l.b16 %v1205
        %v1273 = vunpack.c.l.b16 %v1206
        %v1274 = vunpack.c.l.b16 %v1207
        %v1275 = vunpack.c.l.b16 %v1208
        %v1276 = vunpack.c.l.b16 %v1209
        %v1277 = vunpack.c.l.b16 %v1210
        %v1278 = vunpack.c.l.b16 %v1211
        %v1279 = vunpack.c.l.b16 %v1212
        %v1280 = vunpack.c.l.b16 %v1213
        %v1281 = vunpack.c.l.b16 %v1214
        %v1282 = vunpack.c.l.b16 %v1215
        %v1283 = vunpack.c.l.b16 %v1216
        %v1284 = vunpack.c.l.b16 %v1217
        %v1285 = vunpack.c.l.b16 %v1218
        %v1286 = vunpack.c.l.b16 %v1219
        %v1287 = vunpack.c.l.b16 %v1220
        %v1288 = vunpack.c.l.b16 %v1221
        %v1289 = vunpack.c.l.b16 %v1222
        %v1290 = vunpack.c.l.b16 %v1223
        %v1291 = vunpack.c.l.b16 %v1224
        %v1292 = vunpack.c.l.b16 %v1225
        %v1293 = vunpack.c.l.b16 %v1226
        %v1294 = vunpack.c.l.b16 %v1227
        %v1295 = vunpack.c.l.b16 %v1228
        %v1296 = vpack.c.b16 %v1265, %v1264
        %v1297 = vpack.c.b16 %v1267, %v1266
        %v1298 = vpack.c.b16 %v1269, %v1268
        %v1299 = vpack.c.b16 %v1271, %v1270
        %v1300 = vpack.c.b16 %v1273, %v1272
        %v1301 = vpack.c.b16 %v1275, %v1274
        %v1302 = vpack.c.b16 %v1277, %v1276
        %v1303 = vpack.c.b16 %v1279, %v1278
        %v1304 = vpack.c.b16 %v1281, %v1280
        %v1305 = vpack.c.b16 %v1283, %v1282
        %v1306 = vpack.c.b16 %v1285, %v1284
        %v1307 = vpack.c.b16 %v1287, %v1286
        %v1308 = vpack.c.b16 %v1289, %v1288
        %v1309 = vpack.c.b16 %v1291, %v1290
        %v1310 = vpack.c.b16 %v1293, %v1292
        %v1311 = vpack.c.b16 %v1295, %v1294
        %v1314 = vunpack.c.l.b16 %v1230
        %v1315 = vunpack.c.l.b16 %v1231
        %v1316 = vpack.c.b16 %v1315, %v1314
        %v1318 = vsel %vm682, %v1296, 0
        %v1321 = vsel %vm682, %v1297, 0
        %v1324 = vsel %vm682, %v1298, 0
        %v1327 = vsel %vm682, %v1299, 0
        %v1330 = vsel %vm682, %v1300, 0
        %v1333 = vsel %vm682, %v1301, 0
        %v1336 = vsel %vm682, %v1302, 0
        %v1339 = vsel %vm682, %v1303, 0
        %v1342 = vsel %vm682, %v1304, 0
        %v1345 = vsel %vm682, %v1305, 0
        %v1348 = vsel %vm682, %v1306, 0
        %v1351 = vsel %vm682, %v1307, 0
        %v1354 = vsel %vm682, %v1308, 0
        %v1357 = vsel %vm682, %v1309, 0
        %v1360 = vsel %vm682, %v1310, 0
        %v1363 = vsel %vm682, %v1311, 0
        %v1366 = vsel %vm731, %v1316, 0
        %1368 = vmatprep.subr.bf16.mxu0 0
        %1369 = vmatpush1.bf16.msra.mxu0 %v1366
        %1370 = vmatprep.subr.bf16.mxu0 0
        %1371 = vmatpush1.bf16.msra.mxu0 0
        %1372 = vmatprep.subr.bf16.mxu0 0
        %1373 = vmatpush1.bf16.msra.mxu0 0
        %1374 = vmatprep.subr.bf16.mxu0 0
        %1375 = vmatpush1.bf16.msra.mxu0 0
        %1376 = vmatprep.subr.bf16.mxu0 0
        %1377 = vmatpush1.bf16.msra.mxu0 0
        %1378 = vmatprep.subr.bf16.mxu0 0
        %1379 = vmatpush1.bf16.msra.mxu0 0
        %1380 = vmatprep.subr.bf16.mxu0 0
        %1381 = vmatpush1.bf16.msra.mxu0 0
        %1382 = vmatprep.subr.bf16.mxu0 0
        %1383 = vmatpush1.bf16.msra.mxu0 0
        %1384 = vmatprep.subr.bf16.mxu0 0
        %1385 = vmatpush1.bf16.msra.mxu0 0
        %1386 = vmatprep.subr.bf16.mxu0 0
        %1387 = vmatpush1.bf16.msra.mxu0 0
        %1388 = vmatprep.subr.bf16.mxu0 0
        %1389 = vmatpush1.bf16.msra.mxu0 0
        %1390 = vmatprep.subr.bf16.mxu0 0
        %1391 = vmatpush1.bf16.msra.mxu0 0
        %1392 = vmatprep.subr.bf16.mxu0 0
        %1393 = vmatpush1.bf16.msra.mxu0 0
        %1394 = vmatprep.subr.bf16.mxu0 0
        %1395 = vmatpush1.bf16.msra.mxu0 0
        %1396 = vmatprep.subr.bf16.mxu0 0
        %1397 = vmatpush1.bf16.msra.mxu0 0
        %1398 = vmatprep.subr.bf16.mxu0 0
        %1399 = vmatpush1.bf16.msra.mxu0 0
        %1400 = vmatprep.mubr.bf16.mxu0 0
        %1401 = vmatmul.mubr.bf16.gmra.mrb[0].mxu0 %v1318
        %v1402 = vpop.f32.mrb[0].mxu0
        %v1403 = vadd.f32 0.0, %v1402
        %v1404 = vpop.f32.mrb[0].mxu0
        %v1405 = vpop.f32.mrb[0].mxu0
        %v1406 = vadd.f32 0.0, %v1405
        %v1407 = vpop.f32.mrb[0].mxu0
        %1408 = vmatprep.mubr.bf16.mxu0 0
        %1409 = vmatmul.mubr.bf16.gmra.mrb[0].mxu0 %v1321
        %v1410 = vpop.f32.mrb[0].mxu0
        %v1411 = vadd.f32 0.0, %v1410
        %v1412 = vpop.f32.mrb[0].mxu0
        %v1413 = vpop.f32.mrb[0].mxu0
        %v1414 = vadd.f32 0.0, %v1413
        %v1415 = vpop.f32.mrb[0].mxu0
        %1416 = vmatprep.mubr.bf16.mxu0 0
        %1417 = vmatmul.mubr.bf16.gmra.mrb[0].mxu0 %v1324
        %v1418 = vpop.f32.mrb[0].mxu0
        %v1419 = vadd.f32 0.0, %v1418
        %v1420 = vpop.f32.mrb[0].mxu0
        %v1421 = vpop.f32.mrb[0].mxu0
        %v1422 = vadd.f32 0.0, %v1421
        %v1423 = vpop.f32.mrb[0].mxu0
        %1424 = vmatprep.mubr.bf16.mxu0 0
        %1425 = vmatmul.mubr.bf16.gmra.mrb[0].mxu0 %v1327
        %v1426 = vpop.f32.mrb[0].mxu0
        %v1427 = vadd.f32 0.0, %v1426
        %v1428 = vpop.f32.mrb[0].mxu0
        %v1429 = vpop.f32.mrb[0].mxu0
        %v1430 = vadd.f32 0.0, %v1429
        %v1431 = vpop.f32.mrb[0].mxu0
        %1432 = vmatprep.mubr.bf16.mxu0 0
        %1433 = vmatmul.mubr.bf16.gmra.mrb[0].mxu0 %v1330
        %v1434 = vpop.f32.mrb[0].mxu0
        %v1435 = vadd.f32 0.0, %v1434
        %v1436 = vpop.f32.mrb[0].mxu0
        %v1437 = vpop.f32.mrb[0].mxu0
        %v1438 = vadd.f32 0.0, %v1437
        %v1439 = vpop.f32.mrb[0].mxu0
        %1440 = vmatprep.mubr.bf16.mxu0 0
        %1441 = vmatmul.mubr.bf16.gmra.mrb[0].mxu0 %v1333
        %v1442 = vpop.f32.mrb[0].mxu0
        %v1443 = vadd.f32 0.0, %v1442
        %v1444 = vpop.f32.mrb[0].mxu0
        %v1445 = vpop.f32.mrb[0].mxu0
        %v1446 = vadd.f32 0.0, %v1445
        %v1447 = vpop.f32.mrb[0].mxu0
        %1448 = vmatprep.mubr.bf16.mxu0 0
        %1449 = vmatmul.mubr.bf16.gmra.mrb[0].mxu0 %v1336
        %v1450 = vpop.f32.mrb[0].mxu0
        %v1451 = vadd.f32 0.0, %v1450
        %v1452 = vpop.f32.mrb[0].mxu0
        %v1453 = vpop.f32.mrb[0].mxu0
        %v1454 = vadd.f32 0.0, %v1453
        %v1455 = vpop.f32.mrb[0].mxu0
        %1456 = vmatprep.mubr.bf16.mxu0 0
        %1457 = vmatmul.mubr.bf16.gmra.mrb[0].mxu0 %v1339
        %v1458 = vpop.f32.mrb[0].mxu0
        %v1459 = vadd.f32 0.0, %v1458
        %v1460 = vpop.f32.mrb[0].mxu0
        %v1461 = vpop.f32.mrb[0].mxu0
        %v1462 = vadd.f32 0.0, %v1461
        %v1463 = vpop.f32.mrb[0].mxu0
        %1464 = vmatprep.mubr.bf16.mxu0 0
        %1465 = vmatmul.mubr.bf16.gmra.mrb[0].mxu0 %v1342
        %v1466 = vpop.f32.mrb[0].mxu0
        %v1467 = vadd.f32 0.0, %v1466
        %v1468 = vpop.f32.mrb[0].mxu0
        %v1469 = vpop.f32.mrb[0].mxu0
        %v1470 = vadd.f32 0.0, %v1469
        %v1471 = vpop.f32.mrb[0].mxu0
        %1472 = vmatprep.mubr.bf16.mxu0 0
        %1473 = vmatmul.mubr.bf16.gmra.mrb[0].mxu0 %v1345
        %v1474 = vpop.f32.mrb[0].mxu0
        %v1475 = vadd.f32 0.0, %v1474
        %v1476 = vpop.f32.mrb[0].mxu0
        %v1477 = vpop.f32.mrb[0].mxu0
        %v1478 = vadd.f32 0.0, %v1477
        %v1479 = vpop.f32.mrb[0].mxu0
        %1480 = vmatprep.mubr.bf16.mxu0 0
        %1481 = vmatmul.mubr.bf16.gmra.mrb[0].mxu0 %v1348
        %v1482 = vpop.f32.mrb[0].mxu0
        %v1483 = vadd.f32 0.0, %v1482
        %v1484 = vpop.f32.mrb[0].mxu0
        %v1485 = vpop.f32.mrb[0].mxu0
        %v1486 = vadd.f32 0.0, %v1485
        %v1487 = vpop.f32.mrb[0].mxu0
        %1488 = vmatprep.mubr.bf16.mxu0 0
        %1489 = vmatmul.mubr.bf16.gmra.mrb[0].mxu0 %v1351
        %v1490 = vpop.f32.mrb[0].mxu0
        %v1491 = vadd.f32 0.0, %v1490
        %v1492 = vpop.f32.mrb[0].mxu0
        %v1493 = vpop.f32.mrb[0].mxu0
        %v1494 = vadd.f32 0.0, %v1493
        %v1495 = vpop.f32.mrb[0].mxu0
        %1496 = vmatprep.mubr.bf16.mxu0 0
        %1497 = vmatmul.mubr.bf16.gmra.mrb[0].mxu0 %v1354
        %v1498 = vpop.f32.mrb[0].mxu0
        %v1499 = vadd.f32 0.0, %v1498
        %v1500 = vpop.f32.mrb[0].mxu0
        %v1501 = vpop.f32.mrb[0].mxu0
        %v1502 = vadd.f32 0.0, %v1501
        %v1503 = vpop.f32.mrb[0].mxu0
        %1504 = vmatprep.mubr.bf16.mxu0 0
        %1505 = vmatmul.mubr.bf16.gmra.mrb[0].mxu0 %v1357
        %v1506 = vpop.f32.mrb[0].mxu0
        %v1507 = vadd.f32 0.0, %v1506
        %v1508 = vpop.f32.mrb[0].mxu0
        %v1509 = vpop.f32.mrb[0].mxu0
        %v1510 = vadd.f32 0.0, %v1509
        %v1511 = vpop.f32.mrb[0].mxu0
        %1512 = vmatprep.mubr.bf16.mxu0 0
        %1513 = vmatmul.mubr.bf16.gmra.mrb[0].mxu0 %v1360
        %v1514 = vpop.f32.mrb[0].mxu0
        %v1515 = vadd.f32 0.0, %v1514
        %v1516 = vpop.f32.mrb[0].mxu0
        %v1517 = vpop.f32.mrb[0].mxu0
        %v1518 = vadd.f32 0.0, %v1517
        %v1519 = vpop.f32.mrb[0].mxu0
        %1520 = vmatprep.mubr.bf16.mxu0 0
        %1521 = vmatmul.mubr.bf16.gmra.mrb[0].mxu0 %v1363
        %v1522 = vpop.f32.mrb[0].mxu0
        %v1523 = vadd.f32 0.0, %v1522
        %v1524 = vpop.f32.mrb[0].mxu0
        %v1525 = vpop.f32.mrb[0].mxu0
        %v1526 = vadd.f32 0.0, %v1525
        %v1527 = vpop.f32.mrb[0].mxu0
        %1528 = vdwg.mxu0
        %v1529 = vadd.f32 %v1067, %v1403
        %v1530 = vadd.f32 %v1070, %v1406
        %v1531 = vadd.f32 %v1075, %v1411
        %v1532 = vadd.f32 %v1078, %v1414
        %v1533 = vadd.f32 %v1083, %v1419
        %v1534 = vadd.f32 %v1086, %v1422
        %v1535 = vadd.f32 %v1091, %v1427
        %v1536 = vadd.f32 %v1094, %v1430
        %v1537 = vadd.f32 %v1099, %v1435
        %v1538 = vadd.f32 %v1102, %v1438
        %v1539 = vadd.f32 %v1107, %v1443
        %v1540 = vadd.f32 %v1110, %v1446
        %v1541 = vadd.f32 %v1115, %v1451
        %v1542 = vadd.f32 %v1118, %v1454
        %v1543 = vadd.f32 %v1123, %v1459
        %v1544 = vadd.f32 %v1126, %v1462
        %v1545 = vadd.f32 %v1131, %v1467
        %v1546 = vadd.f32 %v1134, %v1470
        %v1547 = vadd.f32 %v1139, %v1475
        %v1548 = vadd.f32 %v1142, %v1478
        %v1549 = vadd.f32 %v1147, %v1483
        %v1550 = vadd.f32 %v1150, %v1486
        %v1551 = vadd.f32 %v1155, %v1491
        %v1552 = vadd.f32 %v1158, %v1494
        %v1553 = vadd.f32 %v1163, %v1499
        %v1554 = vadd.f32 %v1166, %v1502
        %v1555 = vadd.f32 %v1171, %v1507
        %v1556 = vadd.f32 %v1174, %v1510
        %v1557 = vadd.f32 %v1179, %v1515
        %v1558 = vadd.f32 %v1182, %v1518
        %v1559 = vadd.f32 %v1187, %v1523
        %v1560 = vadd.f32 %v1190, %v1526
        %v1561 = vld [vmem:[%s1196] sm:$0xf]
        %v1562 = vld [vmem:[%s1196 + $0x4] sm:$0xf]
        %v1563 = vld [vmem:[%s1196 + $0x8] sm:$0x1]
        %v1564 = vld [vmem:[%s1196 + $0xc] sm:$0xf]
        %v1565 = vld [vmem:[%s1196 + $0x10] sm:$0xf]
        %v1566 = vld [vmem:[%s1196 + $0x14] sm:$0x1]
        %v1567 = vld [vmem:[%s1196 + $0x18] sm:$0xf]
        %v1568 = vld [vmem:[%s1196 + $0x1c] sm:$0xf]
        %v1569 = vld [vmem:[%s1196 + $0x20] sm:$0x1]
        %v1570 = vld [vmem:[%s1196 + $0x24] sm:$0xf]
        %v1571 = vld [vmem:[%s1196 + $0x28] sm:$0xf]
        %v1572 = vld [vmem:[%s1196 + $0x2c] sm:$0x1]
        %v1573 = vld [vmem:[%s1196 + $0x30] sm:$0xf]
        %v1574 = vld [vmem:[%s1196 + $0x34] sm:$0xf]
        %v1575 = vld [vmem:[%s1196 + $0x38] sm:$0x1]
        %v1576 = vld [vmem:[%s1196 + $0x3c] sm:$0xf]
        %v1577 = vld [vmem:[%s1196 + $0x40] sm:$0xf]
        %v1578 = vld [vmem:[%s1196 + $0x44] sm:$0x1]
        %v1579 = vld [vmem:[%s1196 + $0x48] sm:$0xf]
        %v1580 = vld [vmem:[%s1196 + $0x4c] sm:$0xf]
        %v1581 = vld [vmem:[%s1196 + $0x50] sm:$0x1]
        %v1582 = vld [vmem:[%s1196 + $0x54] sm:$0xf]
        %v1583 = vld [vmem:[%s1196 + $0x58] sm:$0xf]
        %v1584 = vld [vmem:[%s1196 + $0x5c] sm:$0x1]
        %v1585 = vld [vmem:[%s1196 + $0x60] sm:$0xf]
        %v1586 = vld [vmem:[%s1196 + $0x64] sm:$0xf]
        %v1587 = vld [vmem:[%s1196 + $0x68] sm:$0x1]
        %v1588 = vld [vmem:[%s1196 + $0x6c] sm:$0xf]
        %v1589 = vld [vmem:[%s1196 + $0x70] sm:$0xf]
        %v1590 = vld [vmem:[%s1196 + $0x74] sm:$0x1]
        %v1591 = vld [vmem:[%s1196 + $0x78] sm:$0xf]
        %v1592 = vld [vmem:[%s1196 + $0x7c] sm:$0xf]
        %v1593 = vld [vmem:[%s1196 + $0x80] sm:$0x1]
        %v1594 = vld [vmem:[%s1196 + $0x84] sm:$0xf]
        %v1595 = vld [vmem:[%s1196 + $0x88] sm:$0xf]
        %v1596 = vld [vmem:[%s1196 + $0x8c] sm:$0x1]
        %v1597 = vld [vmem:[%s1196 + $0x90] sm:$0xf]
        %v1598 = vld [vmem:[%s1196 + $0x94] sm:$0xf]
        %v1599 = vld [vmem:[%s1196 + $0x98] sm:$0x1]
        %v1600 = vld [vmem:[%s1196 + $0x9c] sm:$0xf]
        %v1601 = vld [vmem:[%s1196 + $0xa0] sm:$0xf]
        %v1602 = vld [vmem:[%s1196 + $0xa4] sm:$0x1]
        %v1603 = vld [vmem:[%s1196 + $0xa8] sm:$0xf]
        %v1604 = vld [vmem:[%s1196 + $0xac] sm:$0xf]
        %v1605 = vld [vmem:[%s1196 + $0xb0] sm:$0x1]
        %v1606 = vld [vmem:[%s1196 + $0xb4] sm:$0xf]
        %v1607 = vld [vmem:[%s1196 + $0xb8] sm:$0xf]
        %v1608 = vld [vmem:[%s1196 + $0xbc] sm:$0x1]
        %v1610 = vshrl.u32 %v1561, 16
        %v1612 = vrot.slane %v1610, 4
        %v1613 = vshll.u32 %v1561, 16
        %v1615 = vrot.slane %v1613, 5
        %v1616 = vor.u32 %v1612, %v1615
        %v1617 = vrot.slane %v1616, 4
        %v1619 = vshll.u32 %v1562, 16
        %v1621 = vrot.slane %v1619, 5
        %v1622 = vsel %vm241, %v1617, %v1621
        %v1623 = vshrl.u32 %v1562, 16
        %v1625 = vrot.slane %v1623, 4
        %v1626 = vor.u32 %v1625, %v1621
        %v1627 = vrot.slane %v1626, 4
        %v1629 = vshll.u32 %v1563, 16
        %v1631 = vrot.slane %v1629, 5
        %v1632 = vsel %vm241, %v1627, %v1631
        %v1634 = vshrl.u32 %v1564, 16
        %v1636 = vrot.slane %v1634, 4
        %v1637 = vshll.u32 %v1564, 16
        %v1639 = vrot.slane %v1637, 5
        %v1640 = vor.u32 %v1636, %v1639
        %v1641 = vrot.slane %v1640, 4
        %v1643 = vshll.u32 %v1565, 16
        %v1645 = vrot.slane %v1643, 5
        %v1646 = vsel %vm241, %v1641, %v1645
        %v1647 = vshrl.u32 %v1565, 16
        %v1649 = vrot.slane %v1647, 4
        %v1650 = vor.u32 %v1649, %v1645
        %v1651 = vrot.slane %v1650, 4
        %v1653 = vshll.u32 %v1566, 16
        %v1655 = vrot.slane %v1653, 5
        %v1656 = vsel %vm241, %v1651, %v1655
        %v1658 = vshrl.u32 %v1567, 16
        %v1660 = vrot.slane %v1658, 4
        %v1661 = vshll.u32 %v1567, 16
        %v1663 = vrot.slane %v1661, 5
        %v1664 = vor.u32 %v1660, %v1663
        %v1665 = vrot.slane %v1664, 4
        %v1667 = vshll.u32 %v1568, 16
        %v1669 = vrot.slane %v1667, 5
        %v1670 = vsel %vm241, %v1665, %v1669
        %v1671 = vshrl.u32 %v1568, 16
        %v1673 = vrot.slane %v1671, 4
        %v1674 = vor.u32 %v1673, %v1669
        %v1675 = vrot.slane %v1674, 4
        %v1677 = vshll.u32 %v1569, 16
        %v1679 = vrot.slane %v1677, 5
        %v1680 = vsel %vm241, %v1675, %v1679
        %v1682 = vshrl.u32 %v1570, 16
        %v1684 = vrot.slane %v1682, 4
        %v1685 = vshll.u32 %v1570, 16
        %v1687 = vrot.slane %v1685, 5
        %v1688 = vor.u32 %v1684, %v1687
        %v1689 = vrot.slane %v1688, 4
        %v1691 = vshll.u32 %v1571, 16
        %v1693 = vrot.slane %v1691, 5
        %v1694 = vsel %vm241, %v1689, %v1693
        %v1695 = vshrl.u32 %v1571, 16
        %v1697 = vrot.slane %v1695, 4
        %v1698 = vor.u32 %v1697, %v1693
        %v1699 = vrot.slane %v1698, 4
        %v1701 = vshll.u32 %v1572, 16
        %v1703 = vrot.slane %v1701, 5
        %v1704 = vsel %vm241, %v1699, %v1703
        %v1706 = vshrl.u32 %v1573, 16
        %v1708 = vrot.slane %v1706, 4
        %v1709 = vshll.u32 %v1573, 16
        %v1711 = vrot.slane %v1709, 5
        %v1712 = vor.u32 %v1708, %v1711
        %v1713 = vrot.slane %v1712, 4
        %v1715 = vshll.u32 %v1574, 16
        %v1717 = vrot.slane %v1715, 5
        %v1718 = vsel %vm241, %v1713, %v1717
        %v1719 = vshrl.u32 %v1574, 16
        %v1721 = vrot.slane %v1719, 4
        %v1722 = vor.u32 %v1721, %v1717
        %v1723 = vrot.slane %v1722, 4
        %v1725 = vshll.u32 %v1575, 16
        %v1727 = vrot.slane %v1725, 5
        %v1728 = vsel %vm241, %v1723, %v1727
        %v1730 = vshrl.u32 %v1576, 16
        %v1732 = vrot.slane %v1730, 4
        %v1733 = vshll.u32 %v1576, 16
        %v1735 = vrot.slane %v1733, 5
        %v1736 = vor.u32 %v1732, %v1735
        %v1737 = vrot.slane %v1736, 4
        %v1739 = vshll.u32 %v1577, 16
        %v1741 = vrot.slane %v1739, 5
        %v1742 = vsel %vm241, %v1737, %v1741
        %v1743 = vshrl.u32 %v1577, 16
        %v1745 = vrot.slane %v1743, 4
        %v1746 = vor.u32 %v1745, %v1741
        %v1747 = vrot.slane %v1746, 4
        %v1749 = vshll.u32 %v1578, 16
        %v1751 = vrot.slane %v1749, 5
        %v1752 = vsel %vm241, %v1747, %v1751
        %v1754 = vshrl.u32 %v1579, 16
        %v1756 = vrot.slane %v1754, 4
        %v1757 = vshll.u32 %v1579, 16
        %v1759 = vrot.slane %v1757, 5
        %v1760 = vor.u32 %v1756, %v1759
        %v1761 = vrot.slane %v1760, 4
        %v1763 = vshll.u32 %v1580, 16
        %v1765 = vrot.slane %v1763, 5
        %v1766 = vsel %vm241, %v1761, %v1765
        %v1767 = vshrl.u32 %v1580, 16
        %v1769 = vrot.slane %v1767, 4
        %v1770 = vor.u32 %v1769, %v1765
        %v1771 = vrot.slane %v1770, 4
        %v1773 = vshll.u32 %v1581, 16
        %v1775 = vrot.slane %v1773, 5
        %v1776 = vsel %vm241, %v1771, %v1775
        %v1778 = vshrl.u32 %v1582, 16
        %v1780 = vrot.slane %v1778, 4
        %v1781 = vshll.u32 %v1582, 16
        %v1783 = vrot.slane %v1781, 5
        %v1784 = vor.u32 %v1780, %v1783
        %v1785 = vrot.slane %v1784, 4
        %v1787 = vshll.u32 %v1583, 16
        %v1789 = vrot.slane %v1787, 5
        %v1790 = vsel %vm241, %v1785, %v1789
        %v1791 = vshrl.u32 %v1583, 16
        %v1793 = vrot.slane %v1791, 4
        %v1794 = vor.u32 %v1793, %v1789
        %v1795 = vrot.slane %v1794, 4
        %v1797 = vshll.u32 %v1584, 16
        %v1799 = vrot.slane %v1797, 5
        %v1800 = vsel %vm241, %v1795, %v1799
        %v1802 = vshrl.u32 %v1585, 16
        %v1804 = vrot.slane %v1802, 4
        %v1805 = vshll.u32 %v1585, 16
        %v1807 = vrot.slane %v1805, 5
        %v1808 = vor.u32 %v1804, %v1807
        %v1809 = vrot.slane %v1808, 4
        %v1811 = vshll.u32 %v1586, 16
        %v1813 = vrot.slane %v1811, 5
        %v1814 = vsel %vm241, %v1809, %v1813
        %v1815 = vshrl.u32 %v1586, 16
        %v1817 = vrot.slane %v1815, 4
        %v1818 = vor.u32 %v1817, %v1813
        %v1819 = vrot.slane %v1818, 4
        %v1821 = vshll.u32 %v1587, 16
        %v1823 = vrot.slane %v1821, 5
        %v1824 = vsel %vm241, %v1819, %v1823
        %v1826 = vshrl.u32 %v1588, 16
        %v1828 = vrot.slane %v1826, 4
        %v1829 = vshll.u32 %v1588, 16
        %v1831 = vrot.slane %v1829, 5
        %v1832 = vor.u32 %v1828, %v1831
        %v1833 = vrot.slane %v1832, 4
        %v1835 = vshll.u32 %v1589, 16
        %v1837 = vrot.slane %v1835, 5
        %v1838 = vsel %vm241, %v1833, %v1837
        %v1839 = vshrl.u32 %v1589, 16
        %v1841 = vrot.slane %v1839, 4
        %v1842 = vor.u32 %v1841, %v1837
        %v1843 = vrot.slane %v1842, 4
        %v1845 = vshll.u32 %v1590, 16
        %v1847 = vrot.slane %v1845, 5
        %v1848 = vsel %vm241, %v1843, %v1847
        %v1850 = vshrl.u32 %v1591, 16
        %v1852 = vrot.slane %v1850, 4
        %v1853 = vshll.u32 %v1591, 16
        %v1855 = vrot.slane %v1853, 5
        %v1856 = vor.u32 %v1852, %v1855
        %v1857 = vrot.slane %v1856, 4
        %v1859 = vshll.u32 %v1592, 16
        %v1861 = vrot.slane %v1859, 5
        %v1862 = vsel %vm241, %v1857, %v1861
        %v1863 = vshrl.u32 %v1592, 16
        %v1865 = vrot.slane %v1863, 4
        %v1866 = vor.u32 %v1865, %v1861
        %v1867 = vrot.slane %v1866, 4
        %v1869 = vshll.u32 %v1593, 16
        %v1871 = vrot.slane %v1869, 5
        %v1872 = vsel %vm241, %v1867, %v1871
        %v1874 = vshrl.u32 %v1594, 16
        %v1876 = vrot.slane %v1874, 4
        %v1877 = vshll.u32 %v1594, 16
        %v1879 = vrot.slane %v1877, 5
        %v1880 = vor.u32 %v1876, %v1879
        %v1881 = vrot.slane %v1880, 4
        %v1883 = vshll.u32 %v1595, 16
        %v1885 = vrot.slane %v1883, 5
        %v1886 = vsel %vm241, %v1881, %v1885
        %v1887 = vshrl.u32 %v1595, 16
        %v1889 = vrot.slane %v1887, 4
        %v1890 = vor.u32 %v1889, %v1885
        %v1891 = vrot.slane %v1890, 4
        %v1893 = vshll.u32 %v1596, 16
        %v1895 = vrot.slane %v1893, 5
        %v1896 = vsel %vm241, %v1891, %v1895
        %v1898 = vshrl.u32 %v1597, 16
        %v1900 = vrot.slane %v1898, 4
        %v1901 = vshll.u32 %v1597, 16
        %v1903 = vrot.slane %v1901, 5
        %v1904 = vor.u32 %v1900, %v1903
        %v1905 = vrot.slane %v1904, 4
        %v1907 = vshll.u32 %v1598, 16
        %v1909 = vrot.slane %v1907, 5
        %v1910 = vsel %vm241, %v1905, %v1909
        %v1911 = vshrl.u32 %v1598, 16
        %v1913 = vrot.slane %v1911, 4
        %v1914 = vor.u32 %v1913, %v1909
        %v1915 = vrot.slane %v1914, 4
        %v1917 = vshll.u32 %v1599, 16
        %v1919 = vrot.slane %v1917, 5
        %v1920 = vsel %vm241, %v1915, %v1919
        %v1922 = vshrl.u32 %v1600, 16
        %v1924 = vrot.slane %v1922, 4
        %v1925 = vshll.u32 %v1600, 16
        %v1927 = vrot.slane %v1925, 5
        %v1928 = vor.u32 %v1924, %v1927
        %v1929 = vrot.slane %v1928, 4
        %v1931 = vshll.u32 %v1601, 16
        %v1933 = vrot.slane %v1931, 5
        %v1934 = vsel %vm241, %v1929, %v1933
        %v1935 = vshrl.u32 %v1601, 16
        %v1937 = vrot.slane %v1935, 4
        %v1938 = vor.u32 %v1937, %v1933
        %v1939 = vrot.slane %v1938, 4
        %v1941 = vshll.u32 %v1602, 16
        %v1943 = vrot.slane %v1941, 5
        %v1944 = vsel %vm241, %v1939, %v1943
        %v1946 = vshrl.u32 %v1603, 16
        %v1948 = vrot.slane %v1946, 4
        %v1949 = vshll.u32 %v1603, 16
        %v1951 = vrot.slane %v1949, 5
        %v1952 = vor.u32 %v1948, %v1951
        %v1953 = vrot.slane %v1952, 4
        %v1955 = vshll.u32 %v1604, 16
        %v1957 = vrot.slane %v1955, 5
        %v1958 = vsel %vm241, %v1953, %v1957
        %v1959 = vshrl.u32 %v1604, 16
        %v1961 = vrot.slane %v1959, 4
        %v1962 = vor.u32 %v1961, %v1957
        %v1963 = vrot.slane %v1962, 4
        %v1965 = vshll.u32 %v1605, 16
        %v1967 = vrot.slane %v1965, 5
        %v1968 = vsel %vm241, %v1963, %v1967
        %v1970 = vshrl.u32 %v1606, 16
        %v1972 = vrot.slane %v1970, 4
        %v1973 = vshll.u32 %v1606, 16
        %v1975 = vrot.slane %v1973, 5
        %v1976 = vor.u32 %v1972, %v1975
        %v1977 = vrot.slane %v1976, 4
        %v1979 = vshll.u32 %v1607, 16
        %v1981 = vrot.slane %v1979, 5
        %v1982 = vsel %vm241, %v1977, %v1981
        %v1983 = vshrl.u32 %v1607, 16
        %v1985 = vrot.slane %v1983, 4
        %v1986 = vor.u32 %v1985, %v1981
        %v1987 = vrot.slane %v1986, 4
        %v1989 = vshll.u32 %v1608, 16
        %v1991 = vrot.slane %v1989, 5
        %v1992 = vsel %vm241, %v1987, %v1991
        %s1993 = scalar_lea.vmem %s1, 24
        %v1994 = vld [vmem:[%s1993] sm:$0xf]
        %v1995 = vld [vmem:[%s1993 + $0x4] sm:$0x3]
        %v1996 = vunpack.c.l.b16 %v1622
        %v1997 = vunpack.c.l.b16 %v1632
        %v1998 = vunpack.c.l.b16 %v1646
        %v1999 = vunpack.c.l.b16 %v1656
        %v2000 = vunpack.c.l.b16 %v1670
        %v2001 = vunpack.c.l.b16 %v1680
        %v2002 = vunpack.c.l.b16 %v1694
        %v2003 = vunpack.c.l.b16 %v1704
        %v2004 = vunpack.c.l.b16 %v1718
        %v2005 = vunpack.c.l.b16 %v1728
        %v2006 = vunpack.c.l.b16 %v1742
        %v2007 = vunpack.c.l.b16 %v1752
        %v2008 = vunpack.c.l.b16 %v1766
        %v2009 = vunpack.c.l.b16 %v1776
        %v2010 = vunpack.c.l.b16 %v1790
        %v2011 = vunpack.c.l.b16 %v1800
        %v2012 = vunpack.c.l.b16 %v1814
        %v2013 = vunpack.c.l.b16 %v1824
        %v2014 = vunpack.c.l.b16 %v1838
        %v2015 = vunpack.c.l.b16 %v1848
        %v2016 = vunpack.c.l.b16 %v1862
        %v2017 = vunpack.c.l.b16 %v1872
        %v2018 = vunpack.c.l.b16 %v1886
        %v2019 = vunpack.c.l.b16 %v1896
        %v2020 = vunpack.c.l.b16 %v1910
        %v2021 = vunpack.c.l.b16 %v1920
        %v2022 = vunpack.c.l.b16 %v1934
        %v2023 = vunpack.c.l.b16 %v1944
        %v2024 = vunpack.c.l.b16 %v1958
        %v2025 = vunpack.c.l.b16 %v1968
        %v2026 = vunpack.c.l.b16 %v1982
        %v2027 = vunpack.c.l.b16 %v1992
        %v2028 = vpack.c.b16 %v1997, %v1996
        %v2029 = vpack.c.b16 %v1999, %v1998
        %v2030 = vpack.c.b16 %v2001, %v2000
        %v2031 = vpack.c.b16 %v2003, %v2002
        %v2032 = vpack.c.b16 %v2005, %v2004
        %v2033 = vpack.c.b16 %v2007, %v2006
        %v2034 = vpack.c.b16 %v2009, %v2008
        %v2035 = vpack.c.b16 %v2011, %v2010
        %v2036 = vpack.c.b16 %v2013, %v2012
        %v2037 = vpack.c.b16 %v2015, %v2014
        %v2038 = vpack.c.b16 %v2017, %v2016
        %v2039 = vpack.c.b16 %v2019, %v2018
        %v2040 = vpack.c.b16 %v2021, %v2020
        %v2041 = vpack.c.b16 %v2023, %v2022
        %v2042 = vpack.c.b16 %v2025, %v2024
        %v2043 = vpack.c.b16 %v2027, %v2026
        %v2046 = vunpack.c.l.b16 %v1994
        %v2047 = vunpack.c.l.b16 %v1995
        %v2048 = vpack.c.b16 %v2047, %v2046
        %v2050 = vsel %vm682, %v2028, 0
        %v2053 = vsel %vm682, %v2029, 0
        %v2056 = vsel %vm682, %v2030, 0
        %v2059 = vsel %vm682, %v2031, 0
        %v2062 = vsel %vm682, %v2032, 0
        %v2065 = vsel %vm682, %v2033, 0
        %v2068 = vsel %vm682, %v2034, 0
        %v2071 = vsel %vm682, %v2035, 0
        %v2074 = vsel %vm682, %v2036, 0
        %v2077 = vsel %vm682, %v2037, 0
        %v2080 = vsel %vm682, %v2038, 0
        %v2083 = vsel %vm682, %v2039, 0
        %v2086 = vsel %vm682, %v2040, 0
        %v2089 = vsel %vm682, %v2041, 0
        %v2092 = vsel %vm682, %v2042, 0
        %v2095 = vsel %vm682, %v2043, 0
        %v2098 = vsel %vm731, %v2048, 0
        %2100 = vmatprep.subr.bf16.mxu0 0
        %2101 = vmatpush1.bf16.msra.mxu0 %v2098
        %2102 = vmatprep.subr.bf16.mxu0 0
        %2103 = vmatpush1.bf16.msra.mxu0 0
        %2104 = vmatprep.subr.bf16.mxu0 0
        %2105 = vmatpush1.bf16.msra.mxu0 0
        %2106 = vmatprep.subr.bf16.mxu0 0
        %2107 = vmatpush1.bf16.msra.mxu0 0
        %2108 = vmatprep.subr.bf16.mxu0 0
        %2109 = vmatpush1.bf16.msra.mxu0 0
        %2110 = vmatprep.subr.bf16.mxu0 0
        %2111 = vmatpush1.bf16.msra.mxu0 0
        %2112 = vmatprep.subr.bf16.mxu0 0
        %2113 = vmatpush1.bf16.msra.mxu0 0
        %2114 = vmatprep.subr.bf16.mxu0 0
        %2115 = vmatpush1.bf16.msra.mxu0 0
        %2116 = vmatprep.subr.bf16.mxu0 0
        %2117 = vmatpush1.bf16.msra.mxu0 0
        %2118 = vmatprep.subr.bf16.mxu0 0
        %2119 = vmatpush1.bf16.msra.mxu0 0
        %2120 = vmatprep.subr.bf16.mxu0 0
        %2121 = vmatpush1.bf16.msra.mxu0 0
        %2122 = vmatprep.subr.bf16.mxu0 0
        %2123 = vmatpush1.bf16.msra.mxu0 0
        %2124 = vmatprep.subr.bf16.mxu0 0
        %2125 = vmatpush1.bf16.msra.mxu0 0
        %2126 = vmatprep.subr.bf16.mxu0 0
        %2127 = vmatpush1.bf16.msra.mxu0 0
        %2128 = vmatprep.subr.bf16.mxu0 0
        %2129 = vmatpush1.bf16.msra.mxu0 0
        %2130 = vmatprep.subr.bf16.mxu0 0
        %2131 = vmatpush1.bf16.msra.mxu0 0
        %2132 = vmatprep.mubr.bf16.mxu0 0
        %2133 = vmatmul.mubr.bf16.gmra.mrb[0].mxu0 %v2050
        %v2134 = vpop.f32.mrb[0].mxu0
        %v2135 = vadd.f32 0.0, %v2134
        %v2136 = vpop.f32.mrb[0].mxu0
        %v2137 = vpop.f32.mrb[0].mxu0
        %v2138 = vadd.f32 0.0, %v2137
        %v2139 = vpop.f32.mrb[0].mxu0
        %2140 = vmatprep.mubr.bf16.mxu0 0
        %2141 = vmatmul.mubr.bf16.gmra.mrb[0].mxu0 %v2053
        %v2142 = vpop.f32.mrb[0].mxu0
        %v2143 = vadd.f32 0.0, %v2142
        %v2144 = vpop.f32.mrb[0].mxu0
        %v2145 = vpop.f32.mrb[0].mxu0
        %v2146 = vadd.f32 0.0, %v2145
        %v2147 = vpop.f32.mrb[0].mxu0
        %2148 = vmatprep.mubr.bf16.mxu0 0
        %2149 = vmatmul.mubr.bf16.gmra.mrb[0].mxu0 %v2056
        %v2150 = vpop.f32.mrb[0].mxu0
        %v2151 = vadd.f32 0.0, %v2150
        %v2152 = vpop.f32.mrb[0].mxu0
        %v2153 = vpop.f32.mrb[0].mxu0
        %v2154 = vadd.f32 0.0, %v2153
        %v2155 = vpop.f32.mrb[0].mxu0
        %2156 = vmatprep.mubr.bf16.mxu0 0
        %2157 = vmatmul.mubr.bf16.gmra.mrb[0].mxu0 %v2059
        %v2158 = vpop.f32.mrb[0].mxu0
        %v2159 = vadd.f32 0.0, %v2158
        %v2160 = vpop.f32.mrb[0].mxu0
        %v2161 = vpop.f32.mrb[0].mxu0
        %v2162 = vadd.f32 0.0, %v2161
        %v2163 = vpop.f32.mrb[0].mxu0
        %2164 = vmatprep.mubr.bf16.mxu0 0
        %2165 = vmatmul.mubr.bf16.gmra.mrb[0].mxu0 %v2062
        %v2166 = vpop.f32.mrb[0].mxu0
        %v2167 = vadd.f32 0.0, %v2166
        %v2168 = vpop.f32.mrb[0].mxu0
        %v2169 = vpop.f32.mrb[0].mxu0
        %v2170 = vadd.f32 0.0, %v2169
        %v2171 = vpop.f32.mrb[0].mxu0
        %2172 = vmatprep.mubr.bf16.mxu0 0
        %2173 = vmatmul.mubr.bf16.gmra.mrb[0].mxu0 %v2065
        %v2174 = vpop.f32.mrb[0].mxu0
        %v2175 = vadd.f32 0.0, %v2174
        %v2176 = vpop.f32.mrb[0].mxu0
        %v2177 = vpop.f32.mrb[0].mxu0
        %v2178 = vadd.f32 0.0, %v2177
        %v2179 = vpop.f32.mrb[0].mxu0
        %2180 = vmatprep.mubr.bf16.mxu0 0
        %2181 = vmatmul.mubr.bf16.gmra.mrb[0].mxu0 %v2068
        %v2182 = vpop.f32.mrb[0].mxu0
        %v2183 = vadd.f32 0.0, %v2182
        %v2184 = vpop.f32.mrb[0].mxu0
        %v2185 = vpop.f32.mrb[0].mxu0
        %v2186 = vadd.f32 0.0, %v2185
        %v2187 = vpop.f32.mrb[0].mxu0
        %2188 = vmatprep.mubr.bf16.mxu0 0
        %2189 = vmatmul.mubr.bf16.gmra.mrb[0].mxu0 %v2071
        %v2190 = vpop.f32.mrb[0].mxu0
        %v2191 = vadd.f32 0.0, %v2190
        %v2192 = vpop.f32.mrb[0].mxu0
        %v2193 = vpop.f32.mrb[0].mxu0
        %v2194 = vadd.f32 0.0, %v2193
        %v2195 = vpop.f32.mrb[0].mxu0
        %2196 = vmatprep.mubr.bf16.mxu0 0
        %2197 = vmatmul.mubr.bf16.gmra.mrb[0].mxu0 %v2074
        %v2198 = vpop.f32.mrb[0].mxu0
        %v2199 = vadd.f32 0.0, %v2198
        %v2200 = vpop.f32.mrb[0].mxu0
        %v2201 = vpop.f32.mrb[0].mxu0
        %v2202 = vadd.f32 0.0, %v2201
        %v2203 = vpop.f32.mrb[0].mxu0
        %2204 = vmatprep.mubr.bf16.mxu0 0
        %2205 = vmatmul.mubr.bf16.gmra.mrb[0].mxu0 %v2077
        %v2206 = vpop.f32.mrb[0].mxu0
        %v2207 = vadd.f32 0.0, %v2206
        %v2208 = vpop.f32.mrb[0].mxu0
        %v2209 = vpop.f32.mrb[0].mxu0
        %v2210 = vadd.f32 0.0, %v2209
        %v2211 = vpop.f32.mrb[0].mxu0
        %2212 = vmatprep.mubr.bf16.mxu0 0
        %2213 = vmatmul.mubr.bf16.gmra.mrb[0].mxu0 %v2080
        %v2214 = vpop.f32.mrb[0].mxu0
        %v2215 = vadd.f32 0.0, %v2214
        %v2216 = vpop.f32.mrb[0].mxu0
        %v2217 = vpop.f32.mrb[0].mxu0
        %v2218 = vadd.f32 0.0, %v2217
        %v2219 = vpop.f32.mrb[0].mxu0
        %2220 = vmatprep.mubr.bf16.mxu0 0
        %2221 = vmatmul.mubr.bf16.gmra.mrb[0].mxu0 %v2083
        %v2222 = vpop.f32.mrb[0].mxu0
        %v2223 = vadd.f32 0.0, %v2222
        %v2224 = vpop.f32.mrb[0].mxu0
        %v2225 = vpop.f32.mrb[0].mxu0
        %v2226 = vadd.f32 0.0, %v2225
        %v2227 = vpop.f32.mrb[0].mxu0
        %2228 = vmatprep.mubr.bf16.mxu0 0
        %2229 = vmatmul.mubr.bf16.gmra.mrb[0].mxu0 %v2086
        %v2230 = vpop.f32.mrb[0].mxu0
        %v2231 = vadd.f32 0.0, %v2230
        %v2232 = vpop.f32.mrb[0].mxu0
        %v2233 = vpop.f32.mrb[0].mxu0
        %v2234 = vadd.f32 0.0, %v2233
        %v2235 = vpop.f32.mrb[0].mxu0
        %2236 = vmatprep.mubr.bf16.mxu0 0
        %2237 = vmatmul.mubr.bf16.gmra.mrb[0].mxu0 %v2089
        %v2238 = vpop.f32.mrb[0].mxu0
        %v2239 = vadd.f32 0.0, %v2238
        %v2240 = vpop.f32.mrb[0].mxu0
        %v2241 = vpop.f32.mrb[0].mxu0
        %v2242 = vadd.f32 0.0, %v2241
        %v2243 = vpop.f32.mrb[0].mxu0
        %2244 = vmatprep.mubr.bf16.mxu0 0
        %2245 = vmatmul.mubr.bf16.gmra.mrb[0].mxu0 %v2092
        %v2246 = vpop.f32.mrb[0].mxu0
        %v2247 = vadd.f32 0.0, %v2246
        %v2248 = vpop.f32.mrb[0].mxu0
        %v2249 = vpop.f32.mrb[0].mxu0
        %v2250 = vadd.f32 0.0, %v2249
        %v2251 = vpop.f32.mrb[0].mxu0
        %2252 = vmatprep.mubr.bf16.mxu0 0
        %2253 = vmatmul.mubr.bf16.gmra.mrb[0].mxu0 %v2095
        %v2254 = vpop.f32.mrb[0].mxu0
        %v2255 = vadd.f32 0.0, %v2254
        %v2256 = vpop.f32.mrb[0].mxu0
        %v2257 = vpop.f32.mrb[0].mxu0
        %v2258 = vadd.f32 0.0, %v2257
        %v2259 = vpop.f32.mrb[0].mxu0
        %2260 = vdwg.mxu0
        %v2261 = vadd.f32 %v1529, %v2135
        %v2262 = vadd.f32 %v1530, %v2138
        %v2263 = vadd.f32 %v1531, %v2143
        %v2264 = vadd.f32 %v1532, %v2146
        %v2265 = vadd.f32 %v1533, %v2151
        %v2266 = vadd.f32 %v1534, %v2154
        %v2267 = vadd.f32 %v1535, %v2159
        %v2268 = vadd.f32 %v1536, %v2162
        %v2269 = vadd.f32 %v1537, %v2167
        %v2270 = vadd.f32 %v1538, %v2170
        %v2271 = vadd.f32 %v1539, %v2175
        %v2272 = vadd.f32 %v1540, %v2178
        %v2273 = vadd.f32 %v1541, %v2183
        %v2274 = vadd.f32 %v1542, %v2186
        %v2275 = vadd.f32 %v1543, %v2191
        %v2276 = vadd.f32 %v1544, %v2194
        %v2277 = vadd.f32 %v1545, %v2199
        %v2278 = vadd.f32 %v1546, %v2202
        %v2279 = vadd.f32 %v1547, %v2207
        %v2280 = vadd.f32 %v1548, %v2210
        %v2281 = vadd.f32 %v1549, %v2215
        %v2282 = vadd.f32 %v1550, %v2218
        %v2283 = vadd.f32 %v1551, %v2223
        %v2284 = vadd.f32 %v1552, %v2226
        %v2285 = vadd.f32 %v1553, %v2231
        %v2286 = vadd.f32 %v1554, %v2234
        %v2287 = vadd.f32 %v1555, %v2239
        %v2288 = vadd.f32 %v1556, %v2242
        %v2289 = vadd.f32 %v1557, %v2247
        %v2290 = vadd.f32 %v1558, %v2250
        %v2291 = vadd.f32 %v1559, %v2255
        %v2292 = vadd.f32 %v1560, %v2258
        %v2293 = vld [vmem:[%s2] sm:$0x1]
        %v2295 = vlaneseq
        %v2296 = vshrl.u32 %v2295, 7
        %v2297 = vsub.s32 0, %v2296
        %v2298 = vrot.slane %v2293, %v2297
        %v2300 = vadd.f32 %v2261, %v2298
        %v2301 = vadd.f32 %v2262, %v2298
        %v2302 = vadd.f32 %v2263, %v2298
        %v2303 = vadd.f32 %v2264, %v2298
        %v2304 = vadd.f32 %v2265, %v2298
        %v2305 = vadd.f32 %v2266, %v2298
        %v2306 = vadd.f32 %v2267, %v2298
        %v2307 = vadd.f32 %v2268, %v2298
        %v2308 = vadd.f32 %v2269, %v2298
        %v2309 = vadd.f32 %v2270, %v2298
        %v2310 = vadd.f32 %v2271, %v2298
        %v2311 = vadd.f32 %v2272, %v2298
        %v2312 = vadd.f32 %v2273, %v2298
        %v2313 = vadd.f32 %v2274, %v2298
        %v2314 = vadd.f32 %v2275, %v2298
        %v2315 = vadd.f32 %v2276, %v2298
        %v2316 = vadd.f32 %v2277, %v2298
        %v2317 = vadd.f32 %v2278, %v2298
        %v2318 = vadd.f32 %v2279, %v2298
        %v2319 = vadd.f32 %v2280, %v2298
        %v2320 = vadd.f32 %v2281, %v2298
        %v2321 = vadd.f32 %v2282, %v2298
        %v2322 = vadd.f32 %v2283, %v2298
        %v2323 = vadd.f32 %v2284, %v2298
        %v2324 = vadd.f32 %v2285, %v2298
        %v2325 = vadd.f32 %v2286, %v2298
        %v2326 = vadd.f32 %v2287, %v2298
        %v2327 = vadd.f32 %v2288, %v2298
        %v2328 = vadd.f32 %v2289, %v2298
        %v2329 = vadd.f32 %v2290, %v2298
        %v2330 = vadd.f32 %v2291, %v2298
        %v2331 = vadd.f32 %v2292, %v2298
        %vm2332 = vcmp.gt.f32.partialorder %v2300, 0.0
        %vm2333 = vcmp.gt.f32.partialorder %v2301, 0.0
        %vm2334 = vcmp.gt.f32.partialorder %v2302, 0.0
        %vm2335 = vcmp.gt.f32.partialorder %v2303, 0.0
        %vm2336 = vcmp.gt.f32.partialorder %v2304, 0.0
        %vm2337 = vcmp.gt.f32.partialorder %v2305, 0.0
        %vm2338 = vcmp.gt.f32.partialorder %v2306, 0.0
        %vm2339 = vcmp.gt.f32.partialorder %v2307, 0.0
        %vm2340 = vcmp.gt.f32.partialorder %v2308, 0.0
        %vm2341 = vcmp.gt.f32.partialorder %v2309, 0.0
        %vm2342 = vcmp.gt.f32.partialorder %v2310, 0.0
        %vm2343 = vcmp.gt.f32.partialorder %v2311, 0.0
        %vm2344 = vcmp.gt.f32.partialorder %v2312, 0.0
        %vm2345 = vcmp.gt.f32.partialorder %v2313, 0.0
        %vm2346 = vcmp.gt.f32.partialorder %v2314, 0.0
        %vm2347 = vcmp.gt.f32.partialorder %v2315, 0.0
        %vm2348 = vcmp.gt.f32.partialorder %v2316, 0.0
        %vm2349 = vcmp.gt.f32.partialorder %v2317, 0.0
        %vm2350 = vcmp.gt.f32.partialorder %v2318, 0.0
        %vm2351 = vcmp.gt.f32.partialorder %v2319, 0.0
        %vm2352 = vcmp.gt.f32.partialorder %v2320, 0.0
        %vm2353 = vcmp.gt.f32.partialorder %v2321, 0.0
        %vm2354 = vcmp.gt.f32.partialorder %v2322, 0.0
        %vm2355 = vcmp.gt.f32.partialorder %v2323, 0.0
        %vm2356 = vcmp.gt.f32.partialorder %v2324, 0.0
        %vm2357 = vcmp.gt.f32.partialorder %v2325, 0.0
        %vm2358 = vcmp.gt.f32.partialorder %v2326, 0.0
        %vm2359 = vcmp.gt.f32.partialorder %v2327, 0.0
        %vm2360 = vcmp.gt.f32.partialorder %v2328, 0.0
        %vm2361 = vcmp.gt.f32.partialorder %v2329, 0.0
        %vm2362 = vcmp.gt.f32.partialorder %v2330, 0.0
        %vm2363 = vcmp.gt.f32.partialorder %v2331, 0.0
        %v2364 = vmul.f32 %v2300, 0.2
        %v2365 = vmul.f32 %v2301, 0.2
        %v2366 = vmul.f32 %v2302, 0.2
        %v2367 = vmul.f32 %v2303, 0.2
        %v2368 = vmul.f32 %v2304, 0.2
        %v2369 = vmul.f32 %v2305, 0.2
        %v2370 = vmul.f32 %v2306, 0.2
        %v2371 = vmul.f32 %v2307, 0.2
        %v2372 = vmul.f32 %v2308, 0.2
        %v2373 = vmul.f32 %v2309, 0.2
        %v2374 = vmul.f32 %v2310, 0.2
        %v2375 = vmul.f32 %v2311, 0.2
        %v2376 = vmul.f32 %v2312, 0.2
        %v2377 = vmul.f32 %v2313, 0.2
        %v2378 = vmul.f32 %v2314, 0.2
        %v2379 = vmul.f32 %v2315, 0.2
        %v2380 = vmul.f32 %v2316, 0.2
        %v2381 = vmul.f32 %v2317, 0.2
        %v2382 = vmul.f32 %v2318, 0.2
        %v2383 = vmul.f32 %v2319, 0.2
        %v2384 = vmul.f32 %v2320, 0.2
        %v2385 = vmul.f32 %v2321, 0.2
        %v2386 = vmul.f32 %v2322, 0.2
        %v2387 = vmul.f32 %v2323, 0.2
        %v2388 = vmul.f32 %v2324, 0.2
        %v2389 = vmul.f32 %v2325, 0.2
        %v2390 = vmul.f32 %v2326, 0.2
        %v2391 = vmul.f32 %v2327, 0.2
        %v2392 = vmul.f32 %v2328, 0.2
        %v2393 = vmul.f32 %v2329, 0.2
        %v2394 = vmul.f32 %v2330, 0.2
        %v2395 = vmul.f32 %v2331, 0.2
        %v2396 = vsel %vm2332, %v2300, %v2364
        %v2397 = vsel %vm2333, %v2301, %v2365
        %v2398 = vsel %vm2334, %v2302, %v2366
        %v2399 = vsel %vm2335, %v2303, %v2367
        %v2400 = vsel %vm2336, %v2304, %v2368
        %v2401 = vsel %vm2337, %v2305, %v2369
        %v2402 = vsel %vm2338, %v2306, %v2370
        %v2403 = vsel %vm2339, %v2307, %v2371
        %v2404 = vsel %vm2340, %v2308, %v2372
        %v2405 = vsel %vm2341, %v2309, %v2373
        %v2406 = vsel %vm2342, %v2310, %v2374
        %v2407 = vsel %vm2343, %v2311, %v2375
        %v2408 = vsel %vm2344, %v2312, %v2376
        %v2409 = vsel %vm2345, %v2313, %v2377
        %v2410 = vsel %vm2346, %v2314, %v2378
        %v2411 = vsel %vm2347, %v2315, %v2379
        %v2412 = vsel %vm2348, %v2316, %v2380
        %v2413 = vsel %vm2349, %v2317, %v2381
        %v2414 = vsel %vm2350, %v2318, %v2382
        %v2415 = vsel %vm2351, %v2319, %v2383
        %v2416 = vsel %vm2352, %v2320, %v2384
        %v2417 = vsel %vm2353, %v2321, %v2385
        %v2418 = vsel %vm2354, %v2322, %v2386
        %v2419 = vsel %vm2355, %v2323, %v2387
        %v2420 = vsel %vm2356, %v2324, %v2388
        %v2421 = vsel %vm2357, %v2325, %v2389
        %v2422 = vsel %vm2358, %v2326, %v2390
        %v2423 = vsel %vm2359, %v2327, %v2391
        %v2424 = vsel %vm2360, %v2328, %v2392
        %v2425 = vsel %vm2361, %v2329, %v2393
        %v2426 = vsel %vm2362, %v2330, %v2394
        %v2427 = vsel %vm2363, %v2331, %v2395
        %v2428 = vpack.c.bf16 %v2397, %v2396
        %v2429 = vpack.c.bf16 %v2399, %v2398
        %v2430 = vpack.c.bf16 %v2401, %v2400
        %v2431 = vpack.c.bf16 %v2403, %v2402
        %v2432 = vpack.c.bf16 %v2405, %v2404
        %v2433 = vpack.c.bf16 %v2407, %v2406
        %v2434 = vpack.c.bf16 %v2409, %v2408
        %v2435 = vpack.c.bf16 %v2411, %v2410
        %v2436 = vpack.c.bf16 %v2413, %v2412
        %v2437 = vpack.c.bf16 %v2415, %v2414
        %v2438 = vpack.c.bf16 %v2417, %v2416
        %v2439 = vpack.c.bf16 %v2419, %v2418
        %v2440 = vpack.c.bf16 %v2421, %v2420
        %v2441 = vpack.c.bf16 %v2423, %v2422
        %v2442 = vpack.c.bf16 %v2425, %v2424
        %v2443 = vpack.c.bf16 %v2427, %v2426
        %v2460 = vunpack.c.l.b16 %v2428
        %v2461 = vunpack.c.h.b16 %v2428
        %v2462 = vunpack.c.l.b16 %v2429
        %v2463 = vunpack.c.h.b16 %v2429
        %v2464 = vunpack.c.l.b16 %v2430
        %v2465 = vunpack.c.h.b16 %v2430
        %v2466 = vunpack.c.l.b16 %v2431
        %v2467 = vunpack.c.h.b16 %v2431
        %v2468 = vunpack.c.l.b16 %v2432
        %v2469 = vunpack.c.h.b16 %v2432
        %v2470 = vunpack.c.l.b16 %v2433
        %v2471 = vunpack.c.h.b16 %v2433
        %v2472 = vunpack.c.l.b16 %v2434
        %v2473 = vunpack.c.h.b16 %v2434
        %v2474 = vunpack.c.l.b16 %v2435
        %v2475 = vunpack.c.h.b16 %v2435
        %v2476 = vunpack.c.l.b16 %v2436
        %v2477 = vunpack.c.h.b16 %v2436
        %v2478 = vunpack.c.l.b16 %v2437
        %v2479 = vunpack.c.h.b16 %v2437
        %v2480 = vunpack.c.l.b16 %v2438
        %v2481 = vunpack.c.h.b16 %v2438
        %v2482 = vunpack.c.l.b16 %v2439
        %v2483 = vunpack.c.h.b16 %v2439
        %v2484 = vunpack.c.l.b16 %v2440
        %v2485 = vunpack.c.h.b16 %v2440
        %v2486 = vunpack.c.l.b16 %v2441
        %v2487 = vunpack.c.h.b16 %v2441
        %v2488 = vunpack.c.l.b16 %v2442
        %v2489 = vunpack.c.h.b16 %v2442
        %v2490 = vunpack.c.l.b16 %v2443
        %v2491 = vunpack.c.h.b16 %v2443
        %v2492 = vpack.c.b16 %v2460, %v2460
        %v2493 = vpack.c.b16 %v2461, %v2461
        %v2494 = vpack.c.b16 %v2462, %v2462
        %v2495 = vpack.c.b16 %v2463, %v2463
        %v2496 = vpack.c.b16 %v2464, %v2464
        %v2497 = vpack.c.b16 %v2465, %v2465
        %v2498 = vpack.c.b16 %v2466, %v2466
        %v2499 = vpack.c.b16 %v2467, %v2467
        %v2500 = vpack.c.b16 %v2468, %v2468
        %v2501 = vpack.c.b16 %v2469, %v2469
        %v2502 = vpack.c.b16 %v2470, %v2470
        %v2503 = vpack.c.b16 %v2471, %v2471
        %v2504 = vpack.c.b16 %v2472, %v2472
        %v2505 = vpack.c.b16 %v2473, %v2473
        %v2506 = vpack.c.b16 %v2474, %v2474
        %v2507 = vpack.c.b16 %v2475, %v2475
        %v2508 = vpack.c.b16 %v2476, %v2476
        %v2509 = vpack.c.b16 %v2477, %v2477
        %v2510 = vpack.c.b16 %v2478, %v2478
        %v2511 = vpack.c.b16 %v2479, %v2479
        %v2512 = vpack.c.b16 %v2480, %v2480
        %v2513 = vpack.c.b16 %v2481, %v2481
        %v2514 = vpack.c.b16 %v2482, %v2482
        %v2515 = vpack.c.b16 %v2483, %v2483
        %v2516 = vpack.c.b16 %v2484, %v2484
        %v2517 = vpack.c.b16 %v2485, %v2485
        %v2518 = vpack.c.b16 %v2486, %v2486
        %v2519 = vpack.c.b16 %v2487, %v2487
        %v2520 = vpack.c.b16 %v2488, %v2488
        %v2521 = vpack.c.b16 %v2489, %v2489
        %v2522 = vpack.c.b16 %v2490, %v2490
        %v2523 = vpack.c.b16 %v2491, %v2491
        %vm2556 = vcmask 125952
        %2557 = vst.msk [vmem:[%s177] sm:$0xf] %vm2556, %v2492
        %2558 = vst.msk [vmem:[%s177 + $0x4] sm:$0xf] %vm2556, %v2493
        %2559 = vst.msk [vmem:[%s177 + $0x8] sm:$0xf] %vm2556, %v2494
        %2560 = vst.msk [vmem:[%s177 + $0xc] sm:$0xf] %vm2556, %v2495
        %2561 = vst.msk [vmem:[%s177 + $0x10] sm:$0xf] %vm2556, %v2496
        %2562 = vst.msk [vmem:[%s177 + $0x14] sm:$0xf] %vm2556, %v2497
        %2563 = vst.msk [vmem:[%s177 + $0x18] sm:$0xf] %vm2556, %v2498
        %2564 = vst.msk [vmem:[%s177 + $0x1c] sm:$0xf] %vm2556, %v2499
        %2565 = vst.msk [vmem:[%s177 + $0x20] sm:$0xf] %vm2556, %v2500
        %2566 = vst.msk [vmem:[%s177 + $0x24] sm:$0xf] %vm2556, %v2501
        %2567 = vst.msk [vmem:[%s177 + $0x28] sm:$0xf] %vm2556, %v2502
        %2568 = vst.msk [vmem:[%s177 + $0x2c] sm:$0xf] %vm2556, %v2503
        %2569 = vst.msk [vmem:[%s177 + $0x30] sm:$0xf] %vm2556, %v2504
        %2570 = vst.msk [vmem:[%s177 + $0x34] sm:$0xf] %vm2556, %v2505
        %2571 = vst.msk [vmem:[%s177 + $0x38] sm:$0xf] %vm2556, %v2506
        %2572 = vst.msk [vmem:[%s177 + $0x3c] sm:$0xf] %vm2556, %v2507
        %2573 = vst.msk [vmem:[%s177 + $0x40] sm:$0xf] %vm2556, %v2508
        %2574 = vst.msk [vmem:[%s177 + $0x44] sm:$0xf] %vm2556, %v2509
        %2575 = vst.msk [vmem:[%s177 + $0x48] sm:$0xf] %vm2556, %v2510
        %2576 = vst.msk [vmem:[%s177 + $0x4c] sm:$0xf] %vm2556, %v2511
        %2577 = vst.msk [vmem:[%s177 + $0x50] sm:$0xf] %vm2556, %v2512
        %2578 = vst.msk [vmem:[%s177 + $0x54] sm:$0xf] %vm2556, %v2513
        %2579 = vst.msk [vmem:[%s177 + $0x58] sm:$0xf] %vm2556, %v2514
        %2580 = vst.msk [vmem:[%s177 + $0x5c] sm:$0xf] %vm2556, %v2515
        %2581 = vst.msk [vmem:[%s177 + $0x60] sm:$0xf] %vm2556, %v2516
        %2582 = vst.msk [vmem:[%s177 + $0x64] sm:$0xf] %vm2556, %v2517
        %2583 = vst.msk [vmem:[%s177 + $0x68] sm:$0xf] %vm2556, %v2518
        %2584 = vst.msk [vmem:[%s177 + $0x6c] sm:$0xf] %vm2556, %v2519
        %2585 = vst.msk [vmem:[%s177 + $0x70] sm:$0xf] %vm2556, %v2520
        %2586 = vst.msk [vmem:[%s177 + $0x74] sm:$0xf] %vm2556, %v2521
        %2587 = vst.msk [vmem:[%s177 + $0x78] sm:$0xf] %vm2556, %v2522
        %2588 = vst.msk [vmem:[%s177 + $0x7c] sm:$0xf] %vm2556, %v2523
        %s2589 = sand.u32 %s107, 1
        %s2590 = scalar_lea.sflag [#allocation3], %s2589
        %s2591 = sand.u32 %s107, 1
        %s2592 = smul.addr %s2591, 128
        %s2593 = scalar_lea.vmem [#allocation2], %s2592
        // Predicated region
        $region33: #{tpu_custom_call.1} parent=31 // pred_check
          %p2594 = pneg %p117
        $region34: #{tpu_custom_call.1} parent=31 // pred_check_branch
          %2596 = sbr.rel (%p2594) target = $region36
        $region35: #{tpu_custom_call.1} parent=31 // pred_region
          %s2597 = smul.u32 16, %s22
          %s2599 = ssub.s32 2048, 2048
          %2600 = vsyncadd %s2590, %s2599
          %s2601 = smul.addr %s2597, 2
          %s2602 = smul.addr %s21, 32
          %s2603 = sadd.s32 %s2601, %s2602
          %s2604 = smul.addr %s2603, 64
          %s2605 = scalar_lea.hbm %s3, %s2604
          %s2606 = sshll.u32 %s2593, 4
          %s2607 = int_to_ptr.vmem [resolvable:$true] %s2606
          %2612 = dma.vmem_to_hbm [thread:$0]  %s2607, 2048, %s2605, %s2590, 64, 64, 4
        $region36: #{tpu_custom_call.1} parent=31 // pred_fallthru
          _
      $region32: #{tpu_custom_call.1} parent=5 // pred_fallthru
        _
      %p2613 = scmp.le.s32.totalorder 2, %s12
      // Predicated region
      $region37: #{tpu_custom_call.1} parent=5 // pred_check
        %p2614 = pneg %p2613
      $region38: #{tpu_custom_call.1} parent=5 // pred_check_branch
        %2616 = sbr.rel (%p2614) target = $region40
      $region39: #{tpu_custom_call.1} parent=5 // pred_region
        %s2617 = ssub.s32 %s12, 2
        // Predicated region
        $region41: #{tpu_custom_call.1} parent=39 // pred_check
          %p2618 = pneg %p123
        $region42: #{tpu_custom_call.1} parent=39 // pred_check_branch
          %2620 = sbr.rel (%p2618) target = $region44
        $region43: #{tpu_custom_call.1} parent=39 // pred_region
          %s2621 = sand.u32 %s108, 1
          %s2622 = scalar_lea.sflag [#allocation3], %s2621
          %s2623 = sand.u32 %s108, 1
          %s2624 = smul.addr %s2623, 128
          %s2625 = scalar_lea.vmem [#allocation2], %s2624
          %2626 = dma.done %s2622, 2048
        $region44: #{tpu_custom_call.1} parent=39 // pred_fallthru
          _
      $region40: #{tpu_custom_call.1} parent=5 // pred_fallthru
        _
    $region6: #{tpu_custom_call.1} parent=1 // loop_footer
      %s16 = sadd.s32 1, %s12
    $region7: #{tpu_custom_call.1} parent=1 // loop_footer_branch
      %11 = sbr.rel target = $region3
    $region8: #{tpu_custom_call.1} parent=1 // loop_exit
      _
    %2627 = vsyncpa [#allocation3], 1
    %s2628 = scalar_lea.sflag [#allocation3], 1
    %2629 = vsyncpa %s2628, 1

</llo_original>
